<compile_context>
chip_gen: v7x
topology: tpu7x:2x2x1
jax: 0.10.0
libtpu: 0.0.40
codegen_flags: <defaults>
</compile_context>

<pallas_src>
import math

import jax
import jax.numpy as jnp
from jax.experimental import pallas as pl
from jax.experimental.pallas import tpu as pltpu


# ---------------------------------------------------------------------------
# Fused kernel: (rows x K) @ (K x C) bf16 matmul with f32 accumulation into
# o_ref, then bias + per-capsule squash on the lane-dense (rows, C) tile.
# The per-capsule reduction / broadcast of the squash factor uses two tiny 0/1
# segment matmuls on the MXU so nothing leaves the lane-dense layout.
# ---------------------------------------------------------------------------
def _primary_caps_kernel(x_ref, w_ref, b_ref, g_ref, gt_ref, o_ref):
    # x_ref : (m_tile, k_tile)  bf16 im2col patches
    # w_ref : (k_tile, C)       bf16 flattened conv weight (block-diag if folded)
    # b_ref : (1, C)            f32 conv bias
    # g_ref : (C, OC)           f32 0/1 segment matrix (col oc sums its OD lanes)
    # gt_ref: (OC, C)           f32 transpose (broadcasts the scale back)
    # o_ref : (m_tile, C)       f32 output block; doubles as the K accumulator
    k_idx = pl.program_id(1)

    @pl.when(k_idx == 0)
    def _init():
        o_ref[...] = jnp.zeros_like(o_ref)

    # bf16 MXU inputs, f32 accumulation (single MXU pass per tile).
    o_ref[...] += jnp.dot(x_ref[...], w_ref[...],
                          preferred_element_type=jnp.float32)

    @pl.when(k_idx == pl.num_programs(1) - 1)
    def _finalize():
        y = o_ref[...] + b_ref[...]                       # (m_tile, C) f32
        y2 = y * y
        # per-capsule squared length via an exact segment-sum on the MXU
        len2 = jnp.dot(y2, g_ref[...],
                       preferred_element_type=jnp.float32,
                       precision=jax.lax.Precision.HIGHEST)
        # squash factor len2/(1+len2)/sqrt(len2); rsqrt + approx recip -> EUP
        scale = len2 * jax.lax.rsqrt(len2) * pl.reciprocal(1.0 + len2,
                                                           approx=True)
        scale_full = jnp.dot(scale, gt_ref[...],
                             preferred_element_type=jnp.float32,
                             precision=jax.lax.Precision.HIGHEST)
        o_ref[...] = y * scale_full


def _vmem_capacity_bytes():
    try:
        cap = int(pltpu.get_tpu_info().vmem_capacity_bytes)
        if cap > 0:
            return cap
    except Exception:
        pass
    return 64 * 1024 * 1024          # conservative (v7x-sized) fallback


# ---------------------------------------------------------------------------
# Wrapper
# ---------------------------------------------------------------------------
def primary_caps_forward(x, conv_w, conv_b, output_caps, output_dim, stride):
    N, C_in, H_in, W_in = x.shape
    C_out, C_in2, kh, kw = conv_w.shape
    assert C_in2 == C_in and C_out == output_caps * output_dim

    Ho = (H_in - kh) // stride + 1
    Wo = (W_in - kw) // stride + 1
    M = N * Ho * Wo
    K = C_in * kh * kw

    # ---- im2col as one fused XLA op ----------------------------------------
    # Output channel ordering is (c_in, dy, dx) (input-channel major), matching
    # the weight flattening below.
    patches = jax.lax.conv_general_dilated_patches(
        x, (kh, kw), (stride, stride), "VALID",
        dimension_numbers=("NCHW", "OIHW", "NCHW"))        # (N, K, Ho, Wo)
    patches = patches.transpose(0, 2, 3, 1).reshape(M, K)  # (M, K)
    # TODO(synk): a fully fused variant would walk the (dy,dx) window in-kernel
    # from an NHWC x ref so the k*k-replicated patch tensor never hits HBM.

    w_mat = conv_w.transpose(1, 2, 3, 0).reshape(K, C_out)  # (K, C_out)
    b_row = conv_b.reshape(1, C_out).astype(jnp.float32)

    # ---- fold rows into lanes when C_out < 128 (lane-dense stores / MXU) ----
    fold = 1
    if C_out < 128 and 128 % C_out == 0:
        f = 128 // C_out
        if f * K * f * C_out * 4 <= 4 * 1024 * 1024:   # keep block-diag W small
            fold = f
    if fold > 1:
        m_fold = pl.cdiv(M, fold) * fold
        if m_fold != M:
            patches = jnp.pad(patches, ((0, m_fold - M), (0, 0)))
        patches = patches.reshape(m_fold // fold, fold * K)
        w_mat = jnp.kron(jnp.eye(fold, dtype=w_mat.dtype), w_mat)  # block-diag
        b_row = jnp.tile(b_row, (1, fold))
    Mf, Kf = patches.shape
    Cf = fold * C_out
    OCf = fold * output_caps

    # 0/1 segment matrices for the per-capsule squash reduce / broadcast.
    cap_of_ch = jnp.arange(Cf, dtype=jnp.int32) // output_dim
    g = (cap_of_ch[:, None] ==
         jnp.arange(OCf, dtype=jnp.int32)[None, :]).astype(jnp.float32)
    gt = g.T

    # bf16 MXU inputs (also halves the HBM bytes of the patch stream).
    patches = patches.astype(jnp.bfloat16)
    w_bf = w_mat.astype(jnp.bfloat16)

    # ---- tiling: full-K residency if it fits, large row tiles ---------------
    vmem_limit = min((_vmem_capacity_bytes() * 5) // 8, 96 * 1024 * 1024)
    budget = (vmem_limit * 3) // 4       # headroom for tile padding / internals

    def vmem_bytes(m_t, k_t):
        return (2 * m_t * k_t * 2            # patches blocks (bf16, 2 buffers)
                + 2 * k_t * Cf * 2           # weight blocks (bf16)
                + 2 * m_t * Cf * 4           # output / accumulator blocks (f32)
                + 2 * (Cf + 2 * Cf * OCf) * 4)   # bias + G + G^T

    base_m = Mf if Mf <= 256 else 256
    if vmem_bytes(base_m, Kf) <= budget:
        k_tile, k_pad = Kf, Kf            # weights fully resident: one DMA total
    else:
        k_tile = 2048                     # fallback: K grid (multiple of 128)
        while k_tile > 128 and vmem_bytes(base_m, k_tile) > budget:
            k_tile //= 2
        k_pad = pl.cdiv(Kf, k_tile) * k_tile
        patches = jnp.pad(patches, ((0, 0), (0, k_pad - Kf)))
        w_bf = jnp.pad(w_bf, ((0, k_pad - Kf), (0, 0)))

    if Mf <= 256:
        m_tile = Mf                       # single full-dim block (always legal)
    else:
        m_tile = 256
        for cand in (2048, 1024, 512):    # biggest that fits & keeps >=2 tiles
            if vmem_bytes(cand, k_tile) <= budget and pl.cdiv(Mf, cand) >= 2:
                m_tile = cand
                break
    m_pad = pl.cdiv(Mf, m_tile) * m_tile
    if m_pad != Mf:
        # TODO(synk): mask the ragged tail row tile in-kernel instead of padding.
        patches = jnp.pad(patches, ((0, m_pad - Mf), (0, 0)))

    grid = (m_pad // m_tile, k_pad // k_tile)

    out_flat = pl.pallas_call(
        _primary_caps_kernel,
        out_shape=jax.ShapeDtypeStruct((m_pad, Cf), jnp.float32),
        grid_spec=pltpu.PrefetchScalarGridSpec(
            num_scalar_prefetch=0,
            grid=grid,
            in_specs=[
                pl.BlockSpec((m_tile, k_tile), lambda i, k: (i, k)),  # patches
                pl.BlockSpec((k_tile, Cf), lambda i, k: (k, 0)),      # weight
                pl.BlockSpec((1, Cf), lambda i, k: (0, 0)),           # bias
                pl.BlockSpec((Cf, OCf), lambda i, k: (0, 0)),         # G
                pl.BlockSpec((OCf, Cf), lambda i, k: (0, 0)),         # G^T
            ],
            out_specs=pl.BlockSpec((m_tile, Cf), lambda i, k: (i, 0)),
        ),
        compiler_params=pltpu.CompilerParams(
            dimension_semantics=("parallel", "arbitrary"),
            vmem_limit_bytes=int(vmem_limit),
        ),
    )(patches, w_bf, b_row, g, gt)

    # ---- final layout to match PyTorch: (N, OC*Ho*Wo, OD) -------------------
    out = out_flat[:Mf].reshape(-1, C_out)[:M]             # un-fold, drop pads
    out = out.reshape(N, Ho, Wo, output_caps, output_dim)
    out = jnp.transpose(out, (0, 3, 1, 2, 4)).reshape(
        N, output_caps * Ho * Wo, output_dim)
    return out.astype(x.dtype)


# ---------------------------------------------------------------------------
# Pure-JAX reference (mirrors the PyTorch forward).  `matmul_input_dtype`
# allows building a bf16-input reference to isolate kernel bugs from the
# intended bf16 MXU rounding.
# ---------------------------------------------------------------------------
def primary_caps_reference(x, conv_w, conv_b, output_caps, output_dim, stride,
                           matmul_input_dtype=jnp.float32):
    out = jax.lax.conv_general_dilated(
        x.astype(matmul_input_dtype), conv_w.astype(matmul_input_dtype),
        window_strides=(stride, stride), padding="VALID",
        dimension_numbers=("NCHW", "OIHW", "NCHW"),
        preferred_element_type=jnp.float32,
        precision=jax.lax.Precision.HIGHEST)
    out = out + conv_b[None, :, None, None]
    N, C, H, W = out.shape
    out = out.reshape(N, output_caps, output_dim, H, W)
    out = jnp.transpose(out, (0, 1, 3, 4, 2)).reshape(
        N, output_caps * H * W, output_dim)
    l2 = jnp.sum(out * out, axis=2, keepdims=True)
    out = out * (l2 / (1.0 + l2) / jnp.sqrt(l2))
    return out


if __name__ == "__main__":
    B, C_IN, H, W = 2, 4, 16, 16
    OC, OD, KSIZE, STRIDE = 4, 8, 5, 2     # C_out = 32, H_out = W_out = 6

    key = jax.random.PRNGKey(0)
    k_w, k_b, k_x = jax.random.split(key, 3)

    # nn.Conv2d default init: uniform(-1/sqrt(fan_in), 1/sqrt(fan_in))
    fan_in = C_IN * KSIZE * KSIZE
    bound = 1.0 / math.sqrt(fan_in)
    conv_w = jax.random.uniform(k_w, (OC * OD, C_IN, KSIZE, KSIZE),
                                jnp.float32, -bound, bound)
    conv_b = jax.random.uniform(k_b, (OC * OD,), jnp.float32, -bound, bound)
    x = jax.random.normal(k_x, (B, C_IN, H, W), jnp.float32)

    out = primary_caps_forward(x, conv_w, conv_b, OC, OD, STRIDE)
    out = jax.block_until_ready(out)

    Ho = (H - KSIZE) // STRIDE + 1
    Wo = (W - KSIZE) // STRIDE + 1
    assert out.shape == (B, OC * Ho * Wo, OD), out.shape

    # Tight check vs. a reference whose matmul inputs are also bf16-rounded
    # (validates indexing / fold / squash logic independent of MXU rounding).
    ref_bf = primary_caps_reference(x, conv_w, conv_b, OC, OD, STRIDE,
                                    matmul_input_dtype=jnp.bfloat16)
    err_bf = float(jnp.max(jnp.abs(out - ref_bf)))
    assert jnp.allclose(out, ref_bf, atol=5e-3, rtol=5e-3), err_bf

    # Module-semantics check vs. the exact f32 reference (PyTorch forward);
    # tolerance reflects the bf16 MXU inputs recommended by the perf review.
    ref_f32 = primary_caps_reference(x, conv_w, conv_b, OC, OD, STRIDE)
    err_f32 = float(jnp.max(jnp.abs(out - ref_f32)))
    assert jnp.allclose(out, ref_f32, atol=2e-2, rtol=2e-2), err_f32

    print("KERNEL_OK")
</pallas_src>

<mosaic_0001>
module attributes {stable_mosaic.version = 11 : i64} {
  func.func @_primary_caps_kernel(%arg0: i32, %arg1: i32, %arg2: memref<18x400xbf16, #tpu.memory_space<vmem>>, %arg3: memref<400x128xbf16, #tpu.memory_space<vmem>>, %arg4: memref<1x128xf32, #tpu.memory_space<vmem>>, %arg5: memref<128x16xf32, #tpu.memory_space<vmem>>, %arg6: memref<16x128xf32, #tpu.memory_space<vmem>>, %arg7: memref<18x128xf32, #tpu.memory_space<vmem>>) attributes {dimension_semantics = [#tpu.dimension_semantics<parallel>, #tpu.dimension_semantics<arbitrary>], iteration_bounds = array<i64: 1, 1>, scalar_prefetch = 0 : i64, scratch_operands = 0 : i64, tpu.core_type = #tpu.core_type<tc>, window_params = [{transform_indices = @transform_0, window_bounds = array<i64: 18, 400>}, {transform_indices = @transform_1, window_bounds = array<i64: 400, 128>}, {pipeline_mode = #tpu.pipeline_mode<synchronous>, transform_indices = @transform_2, window_bounds = array<i64: 1, 128>}, {pipeline_mode = #tpu.pipeline_mode<synchronous>, transform_indices = @transform_3, window_bounds = array<i64: 128, 16>}, {pipeline_mode = #tpu.pipeline_mode<synchronous>, transform_indices = @transform_4, window_bounds = array<i64: 16, 128>}, {transform_indices = @transform_5, window_bounds = array<i64: 18, 128>}]} {
    %c0_i32 = arith.constant 0 : i32
    %0 = arith.cmpi eq, %arg1, %c0_i32 : i32
    %1 = arith.extui %0 : i1 to i32
    %c0_i32_0 = arith.constant 0 : i32
    %2 = arith.cmpi ne, %1, %c0_i32_0 : i32
    scf.if %2 {
      %cst_10 = arith.constant 0.000000e+00 : f32
      %12 = vector.broadcast %cst_10 : f32 to vector<18x128xf32>
      %c0_11 = arith.constant 0 : index
      %c0_12 = arith.constant 0 : index
      %13 = vector.load %arg7[%c0_11, %c0_12] : memref<18x128xf32, #tpu.memory_space<vmem>>, vector<18x128xf32>
      tpu.vector_store %arg7[%c0_11, %c0_12], %12 {strides = array<i32>} : memref<18x128xf32, #tpu.memory_space<vmem>>, vector<18x128xf32>,
    } else {
    }
    %c0 = arith.constant 0 : index
    %c0_1 = arith.constant 0 : index
    %3 = vector.load %arg7[%c0, %c0_1] : memref<18x128xf32, #tpu.memory_space<vmem>>, vector<18x128xf32>
    %c0_2 = arith.constant 0 : index
    %c0_3 = arith.constant 0 : index
    %4 = vector.load %arg2[%c0_2, %c0_3] : memref<18x400xbf16, #tpu.memory_space<vmem>>, vector<18x400xbf16>
    %c0_4 = arith.constant 0 : index
    %c0_5 = arith.constant 0 : index
    %5 = vector.load %arg3[%c0_4, %c0_5] : memref<400x128xbf16, #tpu.memory_space<vmem>>, vector<400x128xbf16>
    %cst = arith.constant dense<0.000000e+00> : vector<18x128xf32>
    %6 = tpu.matmul %4, %5, %cst {dimension_numbers = #tpu.dot_dimension_numbers<[1], [0], [0], [1], [0, 0, 1, 1], [], []>} : vector<18x400xbf16>, vector<400x128xbf16>, vector<18x128xf32> -> vector<18x128xf32>
    %7 = arith.addf %3, %6 : vector<18x128xf32>
    %c0_6 = arith.constant 0 : index
    %c0_7 = arith.constant 0 : index
    %8 = vector.load %arg7[%c0_6, %c0_7] : memref<18x128xf32, #tpu.memory_space<vmem>>, vector<18x128xf32>
    tpu.vector_store %arg7[%c0_6, %c0_7], %7 {strides = array<i32>} : memref<18x128xf32, #tpu.memory_space<vmem>>, vector<18x128xf32>,
    %c0_i32_8 = arith.constant 0 : i32
    %9 = arith.cmpi eq, %arg1, %c0_i32_8 : i32
    %10 = arith.extui %9 : i1 to i32
    %c0_i32_9 = arith.constant 0 : i32
    %11 = arith.cmpi ne, %10, %c0_i32_9 : i32
    scf.if %11 {
      %c0_10 = arith.constant 0 : index
      %c0_11 = arith.constant 0 : index
      %12 = vector.load %arg7[%c0_10, %c0_11] : memref<18x128xf32, #tpu.memory_space<vmem>>, vector<18x128xf32>
      %c0_12 = arith.constant 0 : index
      %c0_13 = arith.constant 0 : index
      %13 = vector.load %arg4[%c0_12, %c0_13] : memref<1x128xf32, #tpu.memory_space<vmem>>, vector<1x128xf32>
      %14 = vector.broadcast %13 : vector<1x128xf32> to vector<18x128xf32>
      %15 = arith.addf %12, %14 : vector<18x128xf32>
      %16 = arith.mulf %15, %15 : vector<18x128xf32>
      %c0_14 = arith.constant 0 : index
      %c0_15 = arith.constant 0 : index
      %17 = vector.load %arg5[%c0_14, %c0_15] : memref<128x16xf32, #tpu.memory_space<vmem>>, vector<128x16xf32>
      %cst_16 = arith.constant dense<0.000000e+00> : vector<18x16xf32>
      %18 = tpu.matmul %16, %17, %cst_16 {dimension_numbers = #tpu.dot_dimension_numbers<[1], [0], [0], [1], [0, 0, 1, 1], [], []>, precision = #tpu.contract_precision<fp32>} : vector<18x128xf32>, vector<128x16xf32>, vector<18x16xf32> -> vector<18x16xf32>
      %19 = math.rsqrt %18 : vector<18x16xf32>
      %20 = arith.mulf %18, %19 : vector<18x16xf32>
      %cst_17 = arith.constant 1.000000e+00 : f32
      %21 = vector.broadcast %cst_17 : f32 to vector<18x16xf32>
      %22 = arith.addf %21, %18 : vector<18x16xf32>
      %23 = tpu.reciprocal %22 {approx = true} : vector<18x16xf32> -> vector<18x16xf32>
      %24 = arith.mulf %20, %23 : vector<18x16xf32>
      %c0_18 = arith.constant 0 : index
      %c0_19 = arith.constant 0 : index
      %25 = vector.load %arg6[%c0_18, %c0_19] : memref<16x128xf32, #tpu.memory_space<vmem>>, vector<16x128xf32>
      %cst_20 = arith.constant dense<0.000000e+00> : vector<18x128xf32>
      %26 = tpu.matmul %24, %25, %cst_20 {dimension_numbers = #tpu.dot_dimension_numbers<[1], [0], [0], [1], [0, 0, 1, 1], [], []>, precision = #tpu.contract_precision<fp32>} : vector<18x16xf32>, vector<16x128xf32>, vector<18x128xf32> -> vector<18x128xf32>
      %27 = arith.mulf %15, %26 : vector<18x128xf32>
      %c0_21 = arith.constant 0 : index
      %c0_22 = arith.constant 0 : index
      %28 = vector.load %arg7[%c0_21, %c0_22] : memref<18x128xf32, #tpu.memory_space<vmem>>, vector<18x128xf32>
      tpu.vector_store %arg7[%c0_21, %c0_22], %27 {strides = array<i32>} : memref<18x128xf32, #tpu.memory_space<vmem>>, vector<18x128xf32>,
    } else {
    }
    return
  }
  func.func @transform_0(%arg0: i32, %arg1: i32) -> (i32, i32) {
    %c0_i32 = arith.constant 0 : i32
    return %arg0, %arg1 : i32, i32
  }
  func.func @transform_1(%arg0: i32, %arg1: i32) -> (i32, i32) {
    %c0_i32 = arith.constant 0 : i32
    %c0_i32_0 = arith.constant 0 : i32
    return %arg1, %c0_i32 : i32, i32
  }
  func.func @transform_2(%arg0: i32, %arg1: i32) -> (i32, i32) {
    %c0_i32 = arith.constant 0 : i32
    %c0_i32_0 = arith.constant 0 : i32
    %c0_i32_1 = arith.constant 0 : i32
    return %c0_i32, %c0_i32_0 : i32, i32
  }
  func.func @transform_3(%arg0: i32, %arg1: i32) -> (i32, i32) {
    %c0_i32 = arith.constant 0 : i32
    %c0_i32_0 = arith.constant 0 : i32
    %c0_i32_1 = arith.constant 0 : i32
    return %c0_i32, %c0_i32_0 : i32, i32
  }
  func.func @transform_4(%arg0: i32, %arg1: i32) -> (i32, i32) {
    %c0_i32 = arith.constant 0 : i32
    %c0_i32_0 = arith.constant 0 : i32
    %c0_i32_1 = arith.constant 0 : i32
    return %c0_i32, %c0_i32_0 : i32, i32
  }
  func.func @transform_5(%arg0: i32, %arg1: i32) -> (i32, i32) {
    %c0_i32 = arith.constant 0 : i32
    %c0_i32_0 = arith.constant 0 : i32
    return %arg0, %c0_i32 : i32, i32
  }
}

</mosaic_0001>

<llo_original>
// kernel: tpu_custom_call.1
$region0: #{tpu_custom_call.1}
  #allocation0 [shape = 'u32[]', space=smem, size = 0x4, offset = 0x4, fixed_abs, tag = 'smem constant byte address 0x4 - core index']
  #allocation1 [shape = 'u32[144,128]{1,0:T(1,128)}', space=vmem, size = 0x12000, scoped, tag = 'internal scratch']
  %s0 = inlined_call_operand.vmem [shape: bf16[18,400], index: 0, kind: input, shape index: {}]
  %s1 = inlined_call_operand.hbm [shape: bf16[400,128], index: 1, kind: input, shape index: {}]
  %s2 = inlined_call_operand.vmem [shape: f32[1,128], index: 2, kind: input, shape index: {}]
  %s3 = inlined_call_operand.vmem [shape: f32[128,16], index: 3, kind: input, shape index: {}]
  %s4 = inlined_call_operand.vmem [shape: f32[16,128], index: 4, kind: input, shape index: {}]
  %s5 = inlined_call_operand.hbm [shape: f32[18,128], index: 5, kind: output, shape index: {}]
  %s6 = sld [smem:[#allocation0]]
  $region42: #{tpu_custom_call.1} parent=0
    _
  %s8 = ssub.s32 1, %s6
  %s9 = scalar_select 0, %s8, %s6
  $region1: #{tpu_custom_call.1} parent=0
    #allocation2 [shape = 'u8[102400]{0}', space=vmem, size = 0x19000, scoped, tag = 'input window, operand 1, single buffered']
    #allocation3 [shape = 's32[1]{0}', space=sflag, size = 0x4, scoped, tag = 'scoped memory for tpu_custom_call.1']
    #allocation4 [shape = 's32[1]{0}', space=sflag, size = 0x4, scoped, tag = 'scoped memory for tpu_custom_call.1']
    #allocation5 [shape = 'u8[12288]{0}', space=vmem, size = 0x3000, scoped, tag = 'output window, operand 0, single buffered']
    %10 = vsyncpa [#allocation3], 0
    %11 = vsyncpa [#allocation4], 0
    // Predicated region
    $region2: #{tpu_custom_call.1} parent=1 // pred_check
      _
    $region3: #{tpu_custom_call.1} parent=1 // pred_check_branch
      %13 = sbr.rel (0) target = $region5
    $region4: #{tpu_custom_call.1} parent=1 // pred_region
      _
    $region5: #{tpu_custom_call.1} parent=1 // pred_fallthru
      _
    // Predicated region
    $region6: #{tpu_custom_call.1} parent=1 // pred_check
      _
    $region7: #{tpu_custom_call.1} parent=1 // pred_check_branch
      %15 = sbr.rel (0) target = $region9
    $region8: #{tpu_custom_call.1} parent=1 // pred_region
      %s17 = ssub.s32 3200, 3200
      %18 = vsyncadd [#allocation3], %s17
      %s19 = sshll.u32 [#allocation2], 4
      %s20 = int_to_ptr.vmem [resolvable:$true] %s19
      %25 = dma.hbm_to_vmem [thread:$0]  %s1, 3200, %s20, [#allocation3], 64, 64, 4
    $region9: #{tpu_custom_call.1} parent=1 // pred_fallthru
      _
    // Predicated region
    $region10: #{tpu_custom_call.1} parent=1 // pred_check
      _
    $region11: #{tpu_custom_call.1} parent=1 // pred_check_branch
      %27 = sbr.rel (0) target = $region13
    $region12: #{tpu_custom_call.1} parent=1 // pred_region
      _
    $region13: #{tpu_custom_call.1} parent=1 // pred_fallthru
      _
    // Predicated region
    $region14: #{tpu_custom_call.1} parent=1 // pred_check
      _
    $region15: #{tpu_custom_call.1} parent=1 // pred_check_branch
      %29 = sbr.rel (0) target = $region17
    $region16: #{tpu_custom_call.1} parent=1 // pred_region
      _
    $region17: #{tpu_custom_call.1} parent=1 // pred_fallthru
      _
    // Predicated region
    $region18: #{tpu_custom_call.1} parent=1 // pred_check
      _
    $region19: #{tpu_custom_call.1} parent=1 // pred_check_branch
      %31 = sbr.rel (0) target = $region21
    $region20: #{tpu_custom_call.1} parent=1 // pred_region
      _
    $region21: #{tpu_custom_call.1} parent=1 // pred_fallthru
      _
    // Predicated region
    $region22: #{tpu_custom_call.1} parent=1 // pred_check
      _
    $region23: #{tpu_custom_call.1} parent=1 // pred_check_branch
      %33 = sbr.rel (0) target = $region25
    $region24: #{tpu_custom_call.1} parent=1 // pred_region
      %34 = dma.done [#allocation3], 3200
    $region25: #{tpu_custom_call.1} parent=1 // pred_fallthru
      _
    %p36 = scmp.eq.s32.totalorder 0, 0
    // Predicated region
    $region26: #{tpu_custom_call.1} parent=1 // pred_check
      %p37 = pneg %p36
    $region27: #{tpu_custom_call.1} parent=1 // pred_check_branch
      %39 = sbr.rel (%p37) target = $region29
    $region28: #{tpu_custom_call.1} parent=1 // pred_region
      %40 = vst [vmem:[#allocation5] sm:$0xff] 0.0
      %41 = vst [vmem:[#allocation5 + $0x8] sm:$0xff] 0.0
      %42 = vst [vmem:[#allocation5 + $0x10] sm:$0x3] 0.0
    $region29: #{tpu_custom_call.1} parent=1 // pred_fallthru
      _
    %v43 = vld [vmem:[#allocation5] sm:$0xff]
    %v44 = vld [vmem:[#allocation5 + $0x8] sm:$0xff]
    %v45 = vld [vmem:[#allocation5 + $0x10] sm:$0x3]
    %v46 = vld [vmem:[%s0] sm:$0xff]
    %v47 = vld [vmem:[%s0 + $0x8] sm:$0xff]
    %v48 = vld [vmem:[%s0 + $0x10] sm:$0xff]
    %v49 = vld [vmem:[%s0 + $0x18] sm:$0xff]
    %v50 = vld [vmem:[%s0 + $0x20] sm:$0x11]
    %v51 = vld [vmem:[%s0 + $0x28] sm:$0x11]
    %v52 = vld [vmem:[#allocation2] sm:$0xf]
    %v53 = vld [vmem:[#allocation2 + $0x4] sm:$0xf]
    %v54 = vld [vmem:[#allocation2 + $0x8] sm:$0xf]
    %v55 = vld [vmem:[#allocation2 + $0xc] sm:$0xf]
    %v56 = vld [vmem:[#allocation2 + $0x10] sm:$0xf]
    %v57 = vld [vmem:[#allocation2 + $0x14] sm:$0xf]
    %v58 = vld [vmem:[#allocation2 + $0x18] sm:$0xf]
    %v59 = vld [vmem:[#allocation2 + $0x1c] sm:$0xf]
    %v60 = vld [vmem:[#allocation2 + $0x20] sm:$0xf]
    %v61 = vld [vmem:[#allocation2 + $0x24] sm:$0xf]
    %v62 = vld [vmem:[#allocation2 + $0x28] sm:$0xf]
    %v63 = vld [vmem:[#allocation2 + $0x2c] sm:$0xf]
    %v64 = vld [vmem:[#allocation2 + $0x30] sm:$0xf]
    %v65 = vld [vmem:[#allocation2 + $0x34] sm:$0xf]
    %v66 = vld [vmem:[#allocation2 + $0x38] sm:$0xf]
    %v67 = vld [vmem:[#allocation2 + $0x3c] sm:$0xf]
    %v68 = vld [vmem:[#allocation2 + $0x40] sm:$0xf]
    %v69 = vld [vmem:[#allocation2 + $0x44] sm:$0xf]
    %v70 = vld [vmem:[#allocation2 + $0x48] sm:$0xf]
    %v71 = vld [vmem:[#allocation2 + $0x4c] sm:$0xf]
    %v72 = vld [vmem:[#allocation2 + $0x50] sm:$0xf]
    %v73 = vld [vmem:[#allocation2 + $0x54] sm:$0xf]
    %v74 = vld [vmem:[#allocation2 + $0x58] sm:$0xf]
    %v75 = vld [vmem:[#allocation2 + $0x5c] sm:$0xf]
    %v76 = vld [vmem:[#allocation2 + $0x60] sm:$0xf]
    %v77 = vld [vmem:[#allocation2 + $0x64] sm:$0xf]
    %v78 = vld [vmem:[#allocation2 + $0x68] sm:$0xf]
    %v79 = vld [vmem:[#allocation2 + $0x6c] sm:$0xf]
    %v80 = vld [vmem:[#allocation2 + $0x70] sm:$0xf]
    %v81 = vld [vmem:[#allocation2 + $0x74] sm:$0xf]
    %v82 = vld [vmem:[#allocation2 + $0x78] sm:$0xf]
    %v83 = vld [vmem:[#allocation2 + $0x7c] sm:$0xf]
    %v84 = vld [vmem:[#allocation2 + $0x80] sm:$0xf]
    %v85 = vld [vmem:[#allocation2 + $0x84] sm:$0xf]
    %v86 = vld [vmem:[#allocation2 + $0x88] sm:$0xf]
    %v87 = vld [vmem:[#allocation2 + $0x8c] sm:$0xf]
    %v88 = vld [vmem:[#allocation2 + $0x90] sm:$0xf]
    %v89 = vld [vmem:[#allocation2 + $0x94] sm:$0xf]
    %v90 = vld [vmem:[#allocation2 + $0x98] sm:$0xf]
    %v91 = vld [vmem:[#allocation2 + $0x9c] sm:$0xf]
    %v92 = vld [vmem:[#allocation2 + $0xa0] sm:$0xf]
    %v93 = vld [vmem:[#allocation2 + $0xa4] sm:$0xf]
    %v94 = vld [vmem:[#allocation2 + $0xa8] sm:$0xf]
    %v95 = vld [vmem:[#allocation2 + $0xac] sm:$0xf]
    %v96 = vld [vmem:[#allocation2 + $0xb0] sm:$0xf]
    %v97 = vld [vmem:[#allocation2 + $0xb4] sm:$0xf]
    %v98 = vld [vmem:[#allocation2 + $0xb8] sm:$0xf]
    %v99 = vld [vmem:[#allocation2 + $0xbc] sm:$0xf]
    %v100 = vld [vmem:[#allocation2 + $0xc0] sm:$0xf]
    %v101 = vld [vmem:[#allocation2 + $0xc4] sm:$0xf]
    %v108 = vunpack.c.l.b16 %v46
    %v109 = vunpack.c.h.b16 %v46
    %v110 = vunpack.c.l.b16 %v47
    %v111 = vunpack.c.h.b16 %v47
    %v112 = vunpack.c.l.b16 %v48
    %v113 = vunpack.c.h.b16 %v48
    %v114 = vunpack.c.l.b16 %v49
    %v115 = vunpack.c.h.b16 %v49
    %v116 = vunpack.c.l.b16 %v50
    %v117 = vunpack.c.h.b16 %v50
    %v118 = vunpack.c.l.b16 %v51
    %v119 = vunpack.c.h.b16 %v51
    %v120 = vpack.c.b16 %v112, %v108
    %v121 = vpack.c.b16 %v113, %v109
    %v122 = vpack.c.b16 %v114, %v110
    %v123 = vpack.c.b16 %v115, %v111
    %v124 = vpack.c.b16 %v116, %v116
    %v125 = vpack.c.b16 %v117, %v117
    %v126 = vpack.c.b16 %v118, %v118
    %v127 = vpack.c.b16 %v119, %v119
    %v184 = vunpack.c.l.b16 %v52
    %v185 = vunpack.c.l.b16 %v53
    %v186 = vunpack.c.l.b16 %v54
    %v187 = vunpack.c.l.b16 %v55
    %v188 = vunpack.c.l.b16 %v56
    %v189 = vunpack.c.l.b16 %v57
    %v190 = vunpack.c.l.b16 %v58
    %v191 = vunpack.c.l.b16 %v59
    %v192 = vunpack.c.l.b16 %v60
    %v193 = vunpack.c.l.b16 %v61
    %v194 = vunpack.c.l.b16 %v62
    %v195 = vunpack.c.l.b16 %v63
    %v196 = vunpack.c.l.b16 %v64
    %v197 = vunpack.c.l.b16 %v65
    %v198 = vunpack.c.l.b16 %v66
    %v199 = vunpack.c.l.b16 %v67
    %v200 = vunpack.c.l.b16 %v68
    %v201 = vunpack.c.l.b16 %v69
    %v202 = vunpack.c.l.b16 %v70
    %v203 = vunpack.c.l.b16 %v71
    %v204 = vunpack.c.l.b16 %v72
    %v205 = vunpack.c.l.b16 %v73
    %v206 = vunpack.c.l.b16 %v74
    %v207 = vunpack.c.l.b16 %v75
    %v208 = vunpack.c.l.b16 %v76
    %v209 = vunpack.c.l.b16 %v77
    %v210 = vunpack.c.l.b16 %v78
    %v211 = vunpack.c.l.b16 %v79
    %v212 = vunpack.c.l.b16 %v80
    %v213 = vunpack.c.l.b16 %v81
    %v214 = vunpack.c.l.b16 %v82
    %v215 = vunpack.c.l.b16 %v83
    %v216 = vunpack.c.l.b16 %v84
    %v217 = vunpack.c.l.b16 %v85
    %v218 = vunpack.c.l.b16 %v86
    %v219 = vunpack.c.l.b16 %v87
    %v220 = vunpack.c.l.b16 %v88
    %v221 = vunpack.c.l.b16 %v89
    %v222 = vunpack.c.l.b16 %v90
    %v223 = vunpack.c.l.b16 %v91
    %v224 = vunpack.c.l.b16 %v92
    %v225 = vunpack.c.l.b16 %v93
    %v226 = vunpack.c.l.b16 %v94
    %v227 = vunpack.c.l.b16 %v95
    %v228 = vunpack.c.l.b16 %v96
    %v229 = vunpack.c.l.b16 %v97
    %v230 = vunpack.c.l.b16 %v98
    %v231 = vunpack.c.l.b16 %v99
    %v232 = vunpack.c.l.b16 %v100
    %v233 = vunpack.c.l.b16 %v101
    %v234 = vpack.c.b16 %v185, %v184
    %v235 = vpack.c.b16 %v187, %v186
    %v236 = vpack.c.b16 %v189, %v188
    %v237 = vpack.c.b16 %v191, %v190
    %v238 = vpack.c.b16 %v193, %v192
    %v239 = vpack.c.b16 %v195, %v194
    %v240 = vpack.c.b16 %v197, %v196
    %v241 = vpack.c.b16 %v199, %v198
    %v242 = vpack.c.b16 %v201, %v200
    %v243 = vpack.c.b16 %v203, %v202
    %v244 = vpack.c.b16 %v205, %v204
    %v245 = vpack.c.b16 %v207, %v206
    %v246 = vpack.c.b16 %v209, %v208
    %v247 = vpack.c.b16 %v211, %v210
    %v248 = vpack.c.b16 %v213, %v212
    %v249 = vpack.c.b16 %v215, %v214
    %v250 = vpack.c.b16 %v217, %v216
    %v251 = vpack.c.b16 %v219, %v218
    %v252 = vpack.c.b16 %v221, %v220
    %v253 = vpack.c.b16 %v223, %v222
    %v254 = vpack.c.b16 %v225, %v224
    %v255 = vpack.c.b16 %v227, %v226
    %v256 = vpack.c.b16 %v229, %v228
    %v257 = vpack.c.b16 %v231, %v230
    %v258 = vpack.c.b16 %v233, %v232
    %vm284 = vcmask 130048
    %v286 = vsel %vm284, %v123, 0
    %v289 = vsel %vm284, %v127, 0
    %291 = vmatprep.subr.bf16.mxu0 0
    %292 = vmatpush1.bf16.msra.mxu0 %v234
    %293 = vmatprep.subr.bf16.mxu0 0
    %294 = vmatpush1.bf16.msra.mxu0 %v235
    %295 = vmatprep.subr.bf16.mxu0 0
    %296 = vmatpush1.bf16.msra.mxu0 %v236
    %297 = vmatprep.subr.bf16.mxu0 0
    %298 = vmatpush1.bf16.msra.mxu0 %v237
    %299 = vmatprep.subr.bf16.mxu0 0
    %300 = vmatpush1.bf16.msra.mxu0 %v238
    %301 = vmatprep.subr.bf16.mxu0 0
    %302 = vmatpush1.bf16.msra.mxu0 %v239
    %303 = vmatprep.subr.bf16.mxu0 0
    %304 = vmatpush1.bf16.msra.mxu0 %v240
    %305 = vmatprep.subr.bf16.mxu0 0
    %306 = vmatpush1.bf16.msra.mxu0 %v241
    %307 = vmatprep.subr.bf16.mxu0 0
    %308 = vmatpush1.bf16.msra.mxu0 %v242
    %309 = vmatprep.subr.bf16.mxu0 0
    %310 = vmatpush1.bf16.msra.mxu0 %v243
    %311 = vmatprep.subr.bf16.mxu0 0
    %312 = vmatpush1.bf16.msra.mxu0 %v244
    %313 = vmatprep.subr.bf16.mxu0 0
    %314 = vmatpush1.bf16.msra.mxu0 %v245
    %315 = vmatprep.subr.bf16.mxu0 0
    %316 = vmatpush1.bf16.msra.mxu0 %v246
    %317 = vmatprep.subr.bf16.mxu0 0
    %318 = vmatpush1.bf16.msra.mxu0 %v247
    %319 = vmatprep.subr.bf16.mxu0 0
    %320 = vmatpush1.bf16.msra.mxu0 %v248
    %321 = vmatprep.subr.bf16.mxu0 0
    %322 = vmatpush1.bf16.msra.mxu0 %v249
    %323 = vmatprep.mubr.bf16.mxu0 %v121
    %324 = vmatmul.mubr.bf16.gmra.mrb[0].mxu0 %v120
    %v325 = vpop.f32.mrb[0].mxu0
    %v326 = vadd.f32 0.0, %v325
    %v327 = vpop.f32.mrb[0].mxu0
    %v328 = vpop.f32.mrb[0].mxu0
    %v329 = vadd.f32 0.0, %v328
    %v330 = vpop.f32.mrb[0].mxu0
    %331 = vmatprep.mubr.bf16.mxu0 %v125
    %332 = vmatmul.mubr.bf16.gmra.mrb[0].mxu0 %v124
    %v333 = vpop.f32.mrb[0].mxu0
    %v334 = vadd.f32 0.0, %v333
    %v335 = vpop.f32.mrb[0].mxu0
    %v336 = vpop.f32.mrb[0].mxu0
    %v337 = vpop.f32.mrb[0].mxu0
    %338 = vdwg.mxu0
    %339 = vmatprep.subr.bf16.mxu0 0
    %340 = vmatpush1.bf16.msra.mxu0 %v250
    %341 = vmatprep.subr.bf16.mxu0 0
    %342 = vmatpush1.bf16.msra.mxu0 %v251
    %343 = vmatprep.subr.bf16.mxu0 0
    %344 = vmatpush1.bf16.msra.mxu0 %v252
    %345 = vmatprep.subr.bf16.mxu0 0
    %346 = vmatpush1.bf16.msra.mxu0 %v253
    %347 = vmatprep.subr.bf16.mxu0 0
    %348 = vmatpush1.bf16.msra.mxu0 %v254
    %349 = vmatprep.subr.bf16.mxu0 0
    %350 = vmatpush1.bf16.msra.mxu0 %v255
    %351 = vmatprep.subr.bf16.mxu0 0
    %352 = vmatpush1.bf16.msra.mxu0 %v256
    %353 = vmatprep.subr.bf16.mxu0 0
    %354 = vmatpush1.bf16.msra.mxu0 %v257
    %355 = vmatprep.subr.bf16.mxu0 0
    %356 = vmatpush1.bf16.msra.mxu0 %v258
    %357 = vmatprep.subr.bf16.mxu0 0
    %358 = vmatpush1.bf16.msra.mxu0 0
    %359 = vmatprep.subr.bf16.mxu0 0
    %360 = vmatpush1.bf16.msra.mxu0 0
    %361 = vmatprep.subr.bf16.mxu0 0
    %362 = vmatpush1.bf16.msra.mxu0 0
    %363 = vmatprep.subr.bf16.mxu0 0
    %364 = vmatpush1.bf16.msra.mxu0 0
    %365 = vmatprep.subr.bf16.mxu0 0
    %366 = vmatpush1.bf16.msra.mxu0 0
    %367 = vmatprep.subr.bf16.mxu0 0
    %368 = vmatpush1.bf16.msra.mxu0 0
    %369 = vmatprep.subr.bf16.mxu0 0
    %370 = vmatpush1.bf16.msra.mxu0 0
    %371 = vmatprep.mubr.bf16.mxu0 %v286
    %372 = vmatmul.mubr.bf16.gmra.mrb[0].mxu0 %v122
    %v373 = vpop.f32.mrb[0].mxu0
    %v374 = vadd.f32 %v326, %v373
    %v375 = vpop.f32.mrb[0].mxu0
    %v376 = vpop.f32.mrb[0].mxu0
    %v377 = vadd.f32 %v329, %v376
    %v378 = vpop.f32.mrb[0].mxu0
    %379 = vmatprep.mubr.bf16.mxu0 %v289
    %380 = vmatmul.mubr.bf16.gmra.mrb[0].mxu0 %v126
    %v381 = vpop.f32.mrb[0].mxu0
    %v382 = vadd.f32 %v334, %v381
    %v383 = vpop.f32.mrb[0].mxu0
    %v384 = vpop.f32.mrb[0].mxu0
    %v385 = vpop.f32.mrb[0].mxu0
    %386 = vdwg.mxu0
    %v387 = vadd.f32 %v43, %v374
    %v388 = vadd.f32 %v44, %v377
    %v389 = vadd.f32 %v45, %v382
    %390 = vst [vmem:[#allocation5] sm:$0xff] %v387
    %391 = vst [vmem:[#allocation5 + $0x8] sm:$0xff] %v388
    %392 = vst [vmem:[#allocation5 + $0x10] sm:$0x3] %v389
    // Predicated region
    $region30: #{tpu_custom_call.1} parent=1 // pred_check
      %p393 = pneg %p36
    $region31: #{tpu_custom_call.1} parent=1 // pred_check_branch
      %395 = sbr.rel (%p393) target = $region33
    $region32: #{tpu_custom_call.1} parent=1 // pred_region
      %v396 = vld [vmem:[#allocation5] sm:$0xff]
      %v397 = vld [vmem:[#allocation5 + $0x8] sm:$0xff]
      %v398 = vld [vmem:[#allocation5 + $0x10] sm:$0x3]
      %v399 = vld [vmem:[%s2] sm:$0x1]
      %v401 = vlaneseq
      %v402 = vshrl.u32 %v401, 7
      %v403 = vsub.s32 0, %v402
      %v404 = vrot.slane %v399, %v403
      %v406 = vadd.f32 %v396, %v404
      %v407 = vadd.f32 %v397, %v404
      %v408 = vadd.f32 %v398, %v404
      %v409 = vmul.f32 %v406, %v406
      %v410 = vmul.f32 %v407, %v407
      %v411 = vmul.f32 %v408, %v408
      %v412 = vld [vmem:[%s3] sm:$0xff]
      %v413 = vld [vmem:[%s3 + $0x8] sm:$0xff]
      %v414 = vld [vmem:[%s3 + $0x10] sm:$0xff]
      %v415 = vld [vmem:[%s3 + $0x18] sm:$0xff]
      %v416 = vld [vmem:[%s3 + $0x20] sm:$0xff]
      %v417 = vld [vmem:[%s3 + $0x28] sm:$0xff]
      %v418 = vld [vmem:[%s3 + $0x30] sm:$0xff]
      %v419 = vld [vmem:[%s3 + $0x38] sm:$0xff]
      %v420 = vld [vmem:[%s3 + $0x40] sm:$0xff]
      %v421 = vld [vmem:[%s3 + $0x48] sm:$0xff]
      %v422 = vld [vmem:[%s3 + $0x50] sm:$0xff]
      %v423 = vld [vmem:[%s3 + $0x58] sm:$0xff]
      %v424 = vld [vmem:[%s3 + $0x60] sm:$0xff]
      %v425 = vld [vmem:[%s3 + $0x68] sm:$0xff]
      %v426 = vld [vmem:[%s3 + $0x70] sm:$0xff]
      %v427 = vld [vmem:[%s3 + $0x78] sm:$0xff]
      %428 = vmatprep.subr.mxu0 0.0
      %v429 = vand.u32 %v412, 4294901760
      %430 = vmatpush1.msra.mxu0 %v429
      %431 = vmatprep.subr.mxu0 0.0
      %v432 = vand.u32 %v413, 4294901760
      %433 = vmatpush1.msra.mxu0 %v432
      %434 = vmatprep.subr.mxu0 0.0
      %v435 = vand.u32 %v414, 4294901760
      %436 = vmatpush1.msra.mxu0 %v435
      %437 = vmatprep.subr.mxu0 0.0
      %v438 = vand.u32 %v415, 4294901760
      %439 = vmatpush1.msra.mxu0 %v438
      %440 = vmatprep.subr.mxu0 0.0
      %v441 = vand.u32 %v416, 4294901760
      %442 = vmatpush1.msra.mxu0 %v441
      %443 = vmatprep.subr.mxu0 0.0
      %v444 = vand.u32 %v417, 4294901760
      %445 = vmatpush1.msra.mxu0 %v444
      %446 = vmatprep.subr.mxu0 0.0
      %v447 = vand.u32 %v418, 4294901760
      %448 = vmatpush1.msra.mxu0 %v447
      %449 = vmatprep.subr.mxu0 0.0
      %v450 = vand.u32 %v419, 4294901760
      %451 = vmatpush1.msra.mxu0 %v450
      %452 = vmatprep.subr.mxu0 0.0
      %v453 = vand.u32 %v420, 4294901760
      %454 = vmatpush1.msra.mxu0 %v453
      %455 = vmatprep.subr.mxu0 0.0
      %v456 = vand.u32 %v421, 4294901760
      %457 = vmatpush1.msra.mxu0 %v456
      %458 = vmatprep.subr.mxu0 0.0
      %v459 = vand.u32 %v422, 4294901760
      %460 = vmatpush1.msra.mxu0 %v459
      %461 = vmatprep.subr.mxu0 0.0
      %v462 = vand.u32 %v423, 4294901760
      %463 = vmatpush1.msra.mxu0 %v462
      %464 = vmatprep.subr.mxu0 0.0
      %v465 = vand.u32 %v424, 4294901760
      %466 = vmatpush1.msra.mxu0 %v465
      %467 = vmatprep.subr.mxu0 0.0
      %v468 = vand.u32 %v425, 4294901760
      %469 = vmatpush1.msra.mxu0 %v468
      %470 = vmatprep.subr.mxu0 0.0
      %v471 = vand.u32 %v426, 4294901760
      %472 = vmatpush1.msra.mxu0 %v471
      %473 = vmatprep.subr.mxu0 0.0
      %v474 = vand.u32 %v427, 4294901760
      %475 = vmatpush1.msra.mxu0 %v474
      %476 = vmatprep.subr.mxu0 0.0
      %477 = vmatpush1.msra.mxu0 0.0
      %478 = vmatprep.subr.mxu0 0.0
      %479 = vmatpush1.msra.mxu0 0.0
      %480 = vmatprep.subr.mxu0 0.0
      %481 = vmatpush1.msra.mxu0 0.0
      %482 = vmatprep.subr.mxu0 0.0
      %483 = vmatpush1.msra.mxu0 0.0
      %484 = vmatprep.subr.mxu0 0.0
      %485 = vmatpush1.msra.mxu0 0.0
      %486 = vmatprep.subr.mxu0 0.0
      %487 = vmatpush1.msra.mxu0 0.0
      %488 = vmatprep.subr.mxu0 0.0
      %489 = vmatpush1.msra.mxu0 0.0
      %490 = vmatprep.subr.mxu0 0.0
      %491 = vmatpush1.msra.mxu0 0.0
      %492 = vmatprep.subr.mxu0 0.0
      %493 = vmatpush1.msra.mxu0 0.0
      %494 = vmatprep.subr.mxu0 0.0
      %495 = vmatpush1.msra.mxu0 0.0
      %496 = vmatprep.subr.mxu0 0.0
      %497 = vmatpush1.msra.mxu0 0.0
      %498 = vmatprep.subr.mxu0 0.0
      %499 = vmatpush1.msra.mxu0 0.0
      %500 = vmatprep.subr.mxu0 0.0
      %501 = vmatpush1.msra.mxu0 0.0
      %502 = vmatprep.subr.mxu0 0.0
      %503 = vmatpush1.msra.mxu0 0.0
      %504 = vmatprep.subr.mxu0 0.0
      %505 = vmatpush1.msra.mxu0 0.0
      %506 = vmatprep.subr.mxu0 0.0
      %507 = vmatpush1.msra.mxu0 0.0
      %508 = vmatprep.mubr.f32.mxu0 0.0
      %v509 = vand.u32 %v409, 4294901760
      %v510 = vsub.f32 %v409, %v509
      %v511 = vand.u32 %v510, 4294901760
      %v512 = vsub.f32 %v510, %v511
      %v513 = vand.u32 %v512, 4294901760
      %514 = vmatmul.mubr.f32.gmra.mrb[0].mxu0 %v513
      %v515 = vpop.f32.mrb[0].mxu0
      %v516 = vadd.f32 0.0, %v515
      %v517 = vpop.f32.mrb[0].mxu0
      %518 = vmatprep.mubr.f32.mxu0 0.0
      %v519 = vand.u32 %v410, 4294901760
      %v520 = vsub.f32 %v410, %v519
      %v521 = vand.u32 %v520, 4294901760
      %v522 = vsub.f32 %v520, %v521
      %v523 = vand.u32 %v522, 4294901760
      %524 = vmatmul.mubr.f32.gmra.mrb[0].mxu0 %v523
      %v525 = vpop.f32.mrb[0].mxu0
      %v526 = vadd.f32 0.0, %v525
      %v527 = vpop.f32.mrb[0].mxu0
      %528 = vmatprep.mubr.f32.mxu0 0.0
      %v529 = vand.u32 %v411, 4294901760
      %v530 = vsub.f32 %v411, %v529
      %v531 = vand.u32 %v530, 4294901760
      %v532 = vsub.f32 %v530, %v531
      %v533 = vand.u32 %v532, 4294901760
      %534 = vmatmul.mubr.f32.gmra.mrb[0].mxu0 %v533
      %v535 = vpop.f32.mrb[0].mxu0
      %v536 = vadd.f32 0.0, %v535
      %v537 = vpop.f32.mrb[0].mxu0
      %538 = vdwg.mxu0
      %539 = vmatprep.subr.mxu0 0.0
      %v540 = vand.u32 %v412, 4294901760
      %v541 = vsub.f32 %v412, %v540
      %v542 = vand.u32 %v541, 4294901760
      %v543 = vsub.f32 %v541, %v542
      %v544 = vand.u32 %v543, 4294901760
      %545 = vmatpush1.msra.mxu0 %v544
      %546 = vmatprep.subr.mxu0 0.0
      %v547 = vand.u32 %v413, 4294901760
      %v548 = vsub.f32 %v413, %v547
      %v549 = vand.u32 %v548, 4294901760
      %v550 = vsub.f32 %v548, %v549
      %v551 = vand.u32 %v550, 4294901760
      %552 = vmatpush1.msra.mxu0 %v551
      %553 = vmatprep.subr.mxu0 0.0
      %v554 = vand.u32 %v414, 4294901760
      %v555 = vsub.f32 %v414, %v554
      %v556 = vand.u32 %v555, 4294901760
      %v557 = vsub.f32 %v555, %v556
      %v558 = vand.u32 %v557, 4294901760
      %559 = vmatpush1.msra.mxu0 %v558
      %560 = vmatprep.subr.mxu0 0.0
      %v561 = vand.u32 %v415, 4294901760
      %v562 = vsub.f32 %v415, %v561
      %v563 = vand.u32 %v562, 4294901760
      %v564 = vsub.f32 %v562, %v563
      %v565 = vand.u32 %v564, 4294901760
      %566 = vmatpush1.msra.mxu0 %v565
      %567 = vmatprep.subr.mxu0 0.0
      %v568 = vand.u32 %v416, 4294901760
      %v569 = vsub.f32 %v416, %v568
      %v570 = vand.u32 %v569, 4294901760
      %v571 = vsub.f32 %v569, %v570
      %v572 = vand.u32 %v571, 4294901760
      %573 = vmatpush1.msra.mxu0 %v572
      %574 = vmatprep.subr.mxu0 0.0
      %v575 = vand.u32 %v417, 4294901760
      %v576 = vsub.f32 %v417, %v575
      %v577 = vand.u32 %v576, 4294901760
      %v578 = vsub.f32 %v576, %v577
      %v579 = vand.u32 %v578, 4294901760
      %580 = vmatpush1.msra.mxu0 %v579
      %581 = vmatprep.subr.mxu0 0.0
      %v582 = vand.u32 %v418, 4294901760
      %v583 = vsub.f32 %v418, %v582
      %v584 = vand.u32 %v583, 4294901760
      %v585 = vsub.f32 %v583, %v584
      %v586 = vand.u32 %v585, 4294901760
      %587 = vmatpush1.msra.mxu0 %v586
      %588 = vmatprep.subr.mxu0 0.0
      %v589 = vand.u32 %v419, 4294901760
      %v590 = vsub.f32 %v419, %v589
      %v591 = vand.u32 %v590, 4294901760
      %v592 = vsub.f32 %v590, %v591
      %v593 = vand.u32 %v592, 4294901760
      %594 = vmatpush1.msra.mxu0 %v593
      %595 = vmatprep.subr.mxu0 0.0
      %v596 = vand.u32 %v420, 4294901760
      %v597 = vsub.f32 %v420, %v596
      %v598 = vand.u32 %v597, 4294901760
      %v599 = vsub.f32 %v597, %v598
      %v600 = vand.u32 %v599, 4294901760
      %601 = vmatpush1.msra.mxu0 %v600
      %602 = vmatprep.subr.mxu0 0.0
      %v603 = vand.u32 %v421, 4294901760
      %v604 = vsub.f32 %v421, %v603
      %v605 = vand.u32 %v604, 4294901760
      %v606 = vsub.f32 %v604, %v605
      %v607 = vand.u32 %v606, 4294901760
      %608 = vmatpush1.msra.mxu0 %v607
      %609 = vmatprep.subr.mxu0 0.0
      %v610 = vand.u32 %v422, 4294901760
      %v611 = vsub.f32 %v422, %v610
      %v612 = vand.u32 %v611, 4294901760
      %v613 = vsub.f32 %v611, %v612
      %v614 = vand.u32 %v613, 4294901760
      %615 = vmatpush1.msra.mxu0 %v614
      %616 = vmatprep.subr.mxu0 0.0
      %v617 = vand.u32 %v423, 4294901760
      %v618 = vsub.f32 %v423, %v617
      %v619 = vand.u32 %v618, 4294901760
      %v620 = vsub.f32 %v618, %v619
      %v621 = vand.u32 %v620, 4294901760
      %622 = vmatpush1.msra.mxu0 %v621
      %623 = vmatprep.subr.mxu0 0.0
      %v624 = vand.u32 %v424, 4294901760
      %v625 = vsub.f32 %v424, %v624
      %v626 = vand.u32 %v625, 4294901760
      %v627 = vsub.f32 %v625, %v626
      %v628 = vand.u32 %v627, 4294901760
      %629 = vmatpush1.msra.mxu0 %v628
      %630 = vmatprep.subr.mxu0 0.0
      %v631 = vand.u32 %v425, 4294901760
      %v632 = vsub.f32 %v425, %v631
      %v633 = vand.u32 %v632, 4294901760
      %v634 = vsub.f32 %v632, %v633
      %v635 = vand.u32 %v634, 4294901760
      %636 = vmatpush1.msra.mxu0 %v635
      %637 = vmatprep.subr.mxu0 0.0
      %v638 = vand.u32 %v426, 4294901760
      %v639 = vsub.f32 %v426, %v638
      %v640 = vand.u32 %v639, 4294901760
      %v641 = vsub.f32 %v639, %v640
      %v642 = vand.u32 %v641, 4294901760
      %643 = vmatpush1.msra.mxu0 %v642
      %644 = vmatprep.subr.mxu0 0.0
      %v645 = vand.u32 %v427, 4294901760
      %v646 = vsub.f32 %v427, %v645
      %v647 = vand.u32 %v646, 4294901760
      %v648 = vsub.f32 %v646, %v647
      %v649 = vand.u32 %v648, 4294901760
      %650 = vmatpush1.msra.mxu0 %v649
      %651 = vmatprep.subr.mxu0 0.0
      %652 = vmatpush1.msra.mxu0 0.0
      %653 = vmatprep.subr.mxu0 0.0
      %654 = vmatpush1.msra.mxu0 0.0
      %655 = vmatprep.subr.mxu0 0.0
      %656 = vmatpush1.msra.mxu0 0.0
      %657 = vmatprep.subr.mxu0 0.0
      %658 = vmatpush1.msra.mxu0 0.0
      %659 = vmatprep.subr.mxu0 0.0
      %660 = vmatpush1.msra.mxu0 0.0
      %661 = vmatprep.subr.mxu0 0.0
      %662 = vmatpush1.msra.mxu0 0.0
      %663 = vmatprep.subr.mxu0 0.0
      %664 = vmatpush1.msra.mxu0 0.0
      %665 = vmatprep.subr.mxu0 0.0
      %666 = vmatpush1.msra.mxu0 0.0
      %667 = vmatprep.subr.mxu0 0.0
      %668 = vmatpush1.msra.mxu0 0.0
      %669 = vmatprep.subr.mxu0 0.0
      %670 = vmatpush1.msra.mxu0 0.0
      %671 = vmatprep.subr.mxu0 0.0
      %672 = vmatpush1.msra.mxu0 0.0
      %673 = vmatprep.subr.mxu0 0.0
      %674 = vmatpush1.msra.mxu0 0.0
      %675 = vmatprep.subr.mxu0 0.0
      %676 = vmatpush1.msra.mxu0 0.0
      %677 = vmatprep.subr.mxu0 0.0
      %678 = vmatpush1.msra.mxu0 0.0
      %679 = vmatprep.subr.mxu0 0.0
      %680 = vmatpush1.msra.mxu0 0.0
      %681 = vmatprep.subr.mxu0 0.0
      %682 = vmatpush1.msra.mxu0 0.0
      %683 = vmatprep.mubr.f32.mxu0 0.0
      %v684 = vand.u32 %v409, 4294901760
      %685 = vmatmul.mubr.f32.gmra.mrb[0].mxu0 %v684
      %v686 = vpop.f32.mrb[0].mxu0
      %v687 = vadd.f32 %v516, %v686
      %v688 = vpop.f32.mrb[0].mxu0
      %689 = vmatprep.mubr.f32.mxu0 0.0
      %v690 = vand.u32 %v410, 4294901760
      %691 = vmatmul.mubr.f32.gmra.mrb[0].mxu0 %v690
      %v692 = vpop.f32.mrb[0].mxu0
      %v693 = vadd.f32 %v526, %v692
      %v694 = vpop.f32.mrb[0].mxu0
      %695 = vmatprep.mubr.f32.mxu0 0.0
      %v696 = vand.u32 %v411, 4294901760
      %697 = vmatmul.mubr.f32.gmra.mrb[0].mxu0 %v696
      %v698 = vpop.f32.mrb[0].mxu0
      %v699 = vadd.f32 %v536, %v698
      %v700 = vpop.f32.mrb[0].mxu0
      %701 = vdwg.mxu0
      %702 = vmatprep.subr.mxu0 0.0
      %v703 = vand.u32 %v412, 4294901760
      %v704 = vsub.f32 %v412, %v703
      %705 = vmatpush1.msra.mxu0 %v704
      %706 = vmatprep.subr.mxu0 0.0
      %v707 = vand.u32 %v413, 4294901760
      %v708 = vsub.f32 %v413, %v707
      %709 = vmatpush1.msra.mxu0 %v708
      %710 = vmatprep.subr.mxu0 0.0
      %v711 = vand.u32 %v414, 4294901760
      %v712 = vsub.f32 %v414, %v711
      %713 = vmatpush1.msra.mxu0 %v712
      %714 = vmatprep.subr.mxu0 0.0
      %v715 = vand.u32 %v415, 4294901760
      %v716 = vsub.f32 %v415, %v715
      %717 = vmatpush1.msra.mxu0 %v716
      %718 = vmatprep.subr.mxu0 0.0
      %v719 = vand.u32 %v416, 4294901760
      %v720 = vsub.f32 %v416, %v719
      %721 = vmatpush1.msra.mxu0 %v720
      %722 = vmatprep.subr.mxu0 0.0
      %v723 = vand.u32 %v417, 4294901760
      %v724 = vsub.f32 %v417, %v723
      %725 = vmatpush1.msra.mxu0 %v724
      %726 = vmatprep.subr.mxu0 0.0
      %v727 = vand.u32 %v418, 4294901760
      %v728 = vsub.f32 %v418, %v727
      %729 = vmatpush1.msra.mxu0 %v728
      %730 = vmatprep.subr.mxu0 0.0
      %v731 = vand.u32 %v419, 4294901760
      %v732 = vsub.f32 %v419, %v731
      %733 = vmatpush1.msra.mxu0 %v732
      %734 = vmatprep.subr.mxu0 0.0
      %v735 = vand.u32 %v420, 4294901760
      %v736 = vsub.f32 %v420, %v735
      %737 = vmatpush1.msra.mxu0 %v736
      %738 = vmatprep.subr.mxu0 0.0
      %v739 = vand.u32 %v421, 4294901760
      %v740 = vsub.f32 %v421, %v739
      %741 = vmatpush1.msra.mxu0 %v740
      %742 = vmatprep.subr.mxu0 0.0
      %v743 = vand.u32 %v422, 4294901760
      %v744 = vsub.f32 %v422, %v743
      %745 = vmatpush1.msra.mxu0 %v744
      %746 = vmatprep.subr.mxu0 0.0
      %v747 = vand.u32 %v423, 4294901760
      %v748 = vsub.f32 %v423, %v747
      %749 = vmatpush1.msra.mxu0 %v748
      %750 = vmatprep.subr.mxu0 0.0
      %v751 = vand.u32 %v424, 4294901760
      %v752 = vsub.f32 %v424, %v751
      %753 = vmatpush1.msra.mxu0 %v752
      %754 = vmatprep.subr.mxu0 0.0
      %v755 = vand.u32 %v425, 4294901760
      %v756 = vsub.f32 %v425, %v755
      %757 = vmatpush1.msra.mxu0 %v756
      %758 = vmatprep.subr.mxu0 0.0
      %v759 = vand.u32 %v426, 4294901760
      %v760 = vsub.f32 %v426, %v759
      %761 = vmatpush1.msra.mxu0 %v760
      %762 = vmatprep.subr.mxu0 0.0
      %v763 = vand.u32 %v427, 4294901760
      %v764 = vsub.f32 %v427, %v763
      %765 = vmatpush1.msra.mxu0 %v764
      %766 = vmatprep.subr.mxu0 0.0
      %767 = vmatpush1.msra.mxu0 0.0
      %768 = vmatprep.subr.mxu0 0.0
      %769 = vmatpush1.msra.mxu0 0.0
      %770 = vmatprep.subr.mxu0 0.0
      %771 = vmatpush1.msra.mxu0 0.0
      %772 = vmatprep.subr.mxu0 0.0
      %773 = vmatpush1.msra.mxu0 0.0
      %774 = vmatprep.subr.mxu0 0.0
      %775 = vmatpush1.msra.mxu0 0.0
      %776 = vmatprep.subr.mxu0 0.0
      %777 = vmatpush1.msra.mxu0 0.0
      %778 = vmatprep.subr.mxu0 0.0
      %779 = vmatpush1.msra.mxu0 0.0
      %780 = vmatprep.subr.mxu0 0.0
      %781 = vmatpush1.msra.mxu0 0.0
      %782 = vmatprep.subr.mxu0 0.0
      %783 = vmatpush1.msra.mxu0 0.0
      %784 = vmatprep.subr.mxu0 0.0
      %785 = vmatpush1.msra.mxu0 0.0
      %786 = vmatprep.subr.mxu0 0.0
      %787 = vmatpush1.msra.mxu0 0.0
      %788 = vmatprep.subr.mxu0 0.0
      %789 = vmatpush1.msra.mxu0 0.0
      %790 = vmatprep.subr.mxu0 0.0
      %791 = vmatpush1.msra.mxu0 0.0
      %792 = vmatprep.subr.mxu0 0.0
      %793 = vmatpush1.msra.mxu0 0.0
      %794 = vmatprep.subr.mxu0 0.0
      %795 = vmatpush1.msra.mxu0 0.0
      %796 = vmatprep.subr.mxu0 0.0
      %797 = vmatpush1.msra.mxu0 0.0
      %798 = vmatprep.mubr.f32.mxu0 0.0
      %v799 = vand.u32 %v409, 4294901760
      %v800 = vsub.f32 %v409, %v799
      %801 = vmatmul.mubr.f32.gmra.mrb[0].mxu0 %v800
      %v802 = vpop.f32.mrb[0].mxu0
      %v803 = vadd.f32 %v687, %v802
      %v804 = vpop.f32.mrb[0].mxu0
      %805 = vmatprep.mubr.f32.mxu0 0.0
      %v806 = vand.u32 %v410, 4294901760
      %v807 = vsub.f32 %v410, %v806
      %808 = vmatmul.mubr.f32.gmra.mrb[0].mxu0 %v807
      %v809 = vpop.f32.mrb[0].mxu0
      %v810 = vadd.f32 %v693, %v809
      %v811 = vpop.f32.mrb[0].mxu0
      %812 = vmatprep.mubr.f32.mxu0 0.0
      %v813 = vand.u32 %v411, 4294901760
      %v814 = vsub.f32 %v411, %v813
      %815 = vmatmul.mubr.f32.gmra.mrb[0].mxu0 %v814
      %v816 = vpop.f32.mrb[0].mxu0
      %v817 = vadd.f32 %v699, %v816
      %v818 = vpop.f32.mrb[0].mxu0
      %819 = vdwg.mxu0
      %820 = vmatprep.subr.mxu0 0.0
      %v821 = vand.u32 %v412, 4294901760
      %822 = vmatpush1.msra.mxu0 %v821
      %823 = vmatprep.subr.mxu0 0.0
      %v824 = vand.u32 %v413, 4294901760
      %825 = vmatpush1.msra.mxu0 %v824
      %826 = vmatprep.subr.mxu0 0.0
      %v827 = vand.u32 %v414, 4294901760
      %828 = vmatpush1.msra.mxu0 %v827
      %829 = vmatprep.subr.mxu0 0.0
      %v830 = vand.u32 %v415, 4294901760
      %831 = vmatpush1.msra.mxu0 %v830
      %832 = vmatprep.subr.mxu0 0.0
      %v833 = vand.u32 %v416, 4294901760
      %834 = vmatpush1.msra.mxu0 %v833
      %835 = vmatprep.subr.mxu0 0.0
      %v836 = vand.u32 %v417, 4294901760
      %837 = vmatpush1.msra.mxu0 %v836
      %838 = vmatprep.subr.mxu0 0.0
      %v839 = vand.u32 %v418, 4294901760
      %840 = vmatpush1.msra.mxu0 %v839
      %841 = vmatprep.subr.mxu0 0.0
      %v842 = vand.u32 %v419, 4294901760
      %843 = vmatpush1.msra.mxu0 %v842
      %844 = vmatprep.subr.mxu0 0.0
      %v845 = vand.u32 %v420, 4294901760
      %846 = vmatpush1.msra.mxu0 %v845
      %847 = vmatprep.subr.mxu0 0.0
      %v848 = vand.u32 %v421, 4294901760
      %849 = vmatpush1.msra.mxu0 %v848
      %850 = vmatprep.subr.mxu0 0.0
      %v851 = vand.u32 %v422, 4294901760
      %852 = vmatpush1.msra.mxu0 %v851
      %853 = vmatprep.subr.mxu0 0.0
      %v854 = vand.u32 %v423, 4294901760
      %855 = vmatpush1.msra.mxu0 %v854
      %856 = vmatprep.subr.mxu0 0.0
      %v857 = vand.u32 %v424, 4294901760
      %858 = vmatpush1.msra.mxu0 %v857
      %859 = vmatprep.subr.mxu0 0.0
      %v860 = vand.u32 %v425, 4294901760
      %861 = vmatpush1.msra.mxu0 %v860
      %862 = vmatprep.subr.mxu0 0.0
      %v863 = vand.u32 %v426, 4294901760
      %864 = vmatpush1.msra.mxu0 %v863
      %865 = vmatprep.subr.mxu0 0.0
      %v866 = vand.u32 %v427, 4294901760
      %867 = vmatpush1.msra.mxu0 %v866
      %868 = vmatprep.subr.mxu0 0.0
      %869 = vmatpush1.msra.mxu0 0.0
      %870 = vmatprep.subr.mxu0 0.0
      %871 = vmatpush1.msra.mxu0 0.0
      %872 = vmatprep.subr.mxu0 0.0
      %873 = vmatpush1.msra.mxu0 0.0
      %874 = vmatprep.subr.mxu0 0.0
      %875 = vmatpush1.msra.mxu0 0.0
      %876 = vmatprep.subr.mxu0 0.0
      %877 = vmatpush1.msra.mxu0 0.0
      %878 = vmatprep.subr.mxu0 0.0
      %879 = vmatpush1.msra.mxu0 0.0
      %880 = vmatprep.subr.mxu0 0.0
      %881 = vmatpush1.msra.mxu0 0.0
      %882 = vmatprep.subr.mxu0 0.0
      %883 = vmatpush1.msra.mxu0 0.0
      %884 = vmatprep.subr.mxu0 0.0
      %885 = vmatpush1.msra.mxu0 0.0
      %886 = vmatprep.subr.mxu0 0.0
      %887 = vmatpush1.msra.mxu0 0.0
      %888 = vmatprep.subr.mxu0 0.0
      %889 = vmatpush1.msra.mxu0 0.0
      %890 = vmatprep.subr.mxu0 0.0
      %891 = vmatpush1.msra.mxu0 0.0
      %892 = vmatprep.subr.mxu0 0.0
      %893 = vmatpush1.msra.mxu0 0.0
      %894 = vmatprep.subr.mxu0 0.0
      %895 = vmatpush1.msra.mxu0 0.0
      %896 = vmatprep.subr.mxu0 0.0
      %897 = vmatpush1.msra.mxu0 0.0
      %898 = vmatprep.subr.mxu0 0.0
      %899 = vmatpush1.msra.mxu0 0.0
      %900 = vmatprep.mubr.f32.mxu0 0.0
      %v901 = vand.u32 %v409, 4294901760
      %v902 = vsub.f32 %v409, %v901
      %v903 = vand.u32 %v902, 4294901760
      %904 = vmatmul.mubr.f32.gmra.mrb[0].mxu0 %v903
      %v905 = vpop.f32.mrb[0].mxu0
      %v906 = vadd.f32 %v803, %v905
      %v907 = vpop.f32.mrb[0].mxu0
      %908 = vmatprep.mubr.f32.mxu0 0.0
      %v909 = vand.u32 %v410, 4294901760
      %v910 = vsub.f32 %v410, %v909
      %v911 = vand.u32 %v910, 4294901760
      %912 = vmatmul.mubr.f32.gmra.mrb[0].mxu0 %v911
      %v913 = vpop.f32.mrb[0].mxu0
      %v914 = vadd.f32 %v810, %v913
      %v915 = vpop.f32.mrb[0].mxu0
      %916 = vmatprep.mubr.f32.mxu0 0.0
      %v917 = vand.u32 %v411, 4294901760
      %v918 = vsub.f32 %v411, %v917
      %v919 = vand.u32 %v918, 4294901760
      %920 = vmatmul.mubr.f32.gmra.mrb[0].mxu0 %v919
      %v921 = vpop.f32.mrb[0].mxu0
      %v922 = vadd.f32 %v817, %v921
      %v923 = vpop.f32.mrb[0].mxu0
      %924 = vdwg.mxu0
      %925 = vmatprep.subr.mxu0 0.0
      %v926 = vand.u32 %v412, 4294901760
      %v927 = vsub.f32 %v412, %v926
      %v928 = vand.u32 %v927, 4294901760
      %929 = vmatpush1.msra.mxu0 %v928
      %930 = vmatprep.subr.mxu0 0.0
      %v931 = vand.u32 %v413, 4294901760
      %v932 = vsub.f32 %v413, %v931
      %v933 = vand.u32 %v932, 4294901760
      %934 = vmatpush1.msra.mxu0 %v933
      %935 = vmatprep.subr.mxu0 0.0
      %v936 = vand.u32 %v414, 4294901760
      %v937 = vsub.f32 %v414, %v936
      %v938 = vand.u32 %v937, 4294901760
      %939 = vmatpush1.msra.mxu0 %v938
      %940 = vmatprep.subr.mxu0 0.0
      %v941 = vand.u32 %v415, 4294901760
      %v942 = vsub.f32 %v415, %v941
      %v943 = vand.u32 %v942, 4294901760
      %944 = vmatpush1.msra.mxu0 %v943
      %945 = vmatprep.subr.mxu0 0.0
      %v946 = vand.u32 %v416, 4294901760
      %v947 = vsub.f32 %v416, %v946
      %v948 = vand.u32 %v947, 4294901760
      %949 = vmatpush1.msra.mxu0 %v948
      %950 = vmatprep.subr.mxu0 0.0
      %v951 = vand.u32 %v417, 4294901760
      %v952 = vsub.f32 %v417, %v951
      %v953 = vand.u32 %v952, 4294901760
      %954 = vmatpush1.msra.mxu0 %v953
      %955 = vmatprep.subr.mxu0 0.0
      %v956 = vand.u32 %v418, 4294901760
      %v957 = vsub.f32 %v418, %v956
      %v958 = vand.u32 %v957, 4294901760
      %959 = vmatpush1.msra.mxu0 %v958
      %960 = vmatprep.subr.mxu0 0.0
      %v961 = vand.u32 %v419, 4294901760
      %v962 = vsub.f32 %v419, %v961
      %v963 = vand.u32 %v962, 4294901760
      %964 = vmatpush1.msra.mxu0 %v963
      %965 = vmatprep.subr.mxu0 0.0
      %v966 = vand.u32 %v420, 4294901760
      %v967 = vsub.f32 %v420, %v966
      %v968 = vand.u32 %v967, 4294901760
      %969 = vmatpush1.msra.mxu0 %v968
      %970 = vmatprep.subr.mxu0 0.0
      %v971 = vand.u32 %v421, 4294901760
      %v972 = vsub.f32 %v421, %v971
      %v973 = vand.u32 %v972, 4294901760
      %974 = vmatpush1.msra.mxu0 %v973
      %975 = vmatprep.subr.mxu0 0.0
      %v976 = vand.u32 %v422, 4294901760
      %v977 = vsub.f32 %v422, %v976
      %v978 = vand.u32 %v977, 4294901760
      %979 = vmatpush1.msra.mxu0 %v978
      %980 = vmatprep.subr.mxu0 0.0
      %v981 = vand.u32 %v423, 4294901760
      %v982 = vsub.f32 %v423, %v981
      %v983 = vand.u32 %v982, 4294901760
      %984 = vmatpush1.msra.mxu0 %v983
      %985 = vmatprep.subr.mxu0 0.0
      %v986 = vand.u32 %v424, 4294901760
      %v987 = vsub.f32 %v424, %v986
      %v988 = vand.u32 %v987, 4294901760
      %989 = vmatpush1.msra.mxu0 %v988
      %990 = vmatprep.subr.mxu0 0.0
      %v991 = vand.u32 %v425, 4294901760
      %v992 = vsub.f32 %v425, %v991
      %v993 = vand.u32 %v992, 4294901760
      %994 = vmatpush1.msra.mxu0 %v993
      %995 = vmatprep.subr.mxu0 0.0
      %v996 = vand.u32 %v426, 4294901760
      %v997 = vsub.f32 %v426, %v996
      %v998 = vand.u32 %v997, 4294901760
      %999 = vmatpush1.msra.mxu0 %v998
      %1000 = vmatprep.subr.mxu0 0.0
      %v1001 = vand.u32 %v427, 4294901760
      %v1002 = vsub.f32 %v427, %v1001
      %v1003 = vand.u32 %v1002, 4294901760
      %1004 = vmatpush1.msra.mxu0 %v1003
      %1005 = vmatprep.subr.mxu0 0.0
      %1006 = vmatpush1.msra.mxu0 0.0
      %1007 = vmatprep.subr.mxu0 0.0
      %1008 = vmatpush1.msra.mxu0 0.0
      %1009 = vmatprep.subr.mxu0 0.0
      %1010 = vmatpush1.msra.mxu0 0.0
      %1011 = vmatprep.subr.mxu0 0.0
      %1012 = vmatpush1.msra.mxu0 0.0
      %1013 = vmatprep.subr.mxu0 0.0
      %1014 = vmatpush1.msra.mxu0 0.0
      %1015 = vmatprep.subr.mxu0 0.0
      %1016 = vmatpush1.msra.mxu0 0.0
      %1017 = vmatprep.subr.mxu0 0.0
      %1018 = vmatpush1.msra.mxu0 0.0
      %1019 = vmatprep.subr.mxu0 0.0
      %1020 = vmatpush1.msra.mxu0 0.0
      %1021 = vmatprep.subr.mxu0 0.0
      %1022 = vmatpush1.msra.mxu0 0.0
      %1023 = vmatprep.subr.mxu0 0.0
      %1024 = vmatpush1.msra.mxu0 0.0
      %1025 = vmatprep.subr.mxu0 0.0
      %1026 = vmatpush1.msra.mxu0 0.0
      %1027 = vmatprep.subr.mxu0 0.0
      %1028 = vmatpush1.msra.mxu0 0.0
      %1029 = vmatprep.subr.mxu0 0.0
      %1030 = vmatpush1.msra.mxu0 0.0
      %1031 = vmatprep.subr.mxu0 0.0
      %1032 = vmatpush1.msra.mxu0 0.0
      %1033 = vmatprep.subr.mxu0 0.0
      %1034 = vmatpush1.msra.mxu0 0.0
      %1035 = vmatprep.subr.mxu0 0.0
      %1036 = vmatpush1.msra.mxu0 0.0
      %1037 = vmatprep.mubr.f32.mxu0 0.0
      %v1038 = vand.u32 %v409, 4294901760
      %1039 = vmatmul.mubr.f32.gmra.mrb[0].mxu0 %v1038
      %v1040 = vpop.f32.mrb[0].mxu0
      %v1041 = vadd.f32 %v906, %v1040
      %v1042 = vpop.f32.mrb[0].mxu0
      %1043 = vmatprep.mubr.f32.mxu0 0.0
      %v1044 = vand.u32 %v410, 4294901760
      %1045 = vmatmul.mubr.f32.gmra.mrb[0].mxu0 %v1044
      %v1046 = vpop.f32.mrb[0].mxu0
      %v1047 = vadd.f32 %v914, %v1046
      %v1048 = vpop.f32.mrb[0].mxu0
      %1049 = vmatprep.mubr.f32.mxu0 0.0
      %v1050 = vand.u32 %v411, 4294901760
      %1051 = vmatmul.mubr.f32.gmra.mrb[0].mxu0 %v1050
      %v1052 = vpop.f32.mrb[0].mxu0
      %v1053 = vadd.f32 %v922, %v1052
      %v1054 = vpop.f32.mrb[0].mxu0
      %1055 = vdwg.mxu0
      %1056 = vmatprep.subr.mxu0 0.0
      %v1057 = vand.u32 %v412, 4294901760
      %1058 = vmatpush1.msra.mxu0 %v1057
      %1059 = vmatprep.subr.mxu0 0.0
      %v1060 = vand.u32 %v413, 4294901760
      %1061 = vmatpush1.msra.mxu0 %v1060
      %1062 = vmatprep.subr.mxu0 0.0
      %v1063 = vand.u32 %v414, 4294901760
      %1064 = vmatpush1.msra.mxu0 %v1063
      %1065 = vmatprep.subr.mxu0 0.0
      %v1066 = vand.u32 %v415, 4294901760
      %1067 = vmatpush1.msra.mxu0 %v1066
      %1068 = vmatprep.subr.mxu0 0.0
      %v1069 = vand.u32 %v416, 4294901760
      %1070 = vmatpush1.msra.mxu0 %v1069
      %1071 = vmatprep.subr.mxu0 0.0
      %v1072 = vand.u32 %v417, 4294901760
      %1073 = vmatpush1.msra.mxu0 %v1072
      %1074 = vmatprep.subr.mxu0 0.0
      %v1075 = vand.u32 %v418, 4294901760
      %1076 = vmatpush1.msra.mxu0 %v1075
      %1077 = vmatprep.subr.mxu0 0.0
      %v1078 = vand.u32 %v419, 4294901760
      %1079 = vmatpush1.msra.mxu0 %v1078
      %1080 = vmatprep.subr.mxu0 0.0
      %v1081 = vand.u32 %v420, 4294901760
      %1082 = vmatpush1.msra.mxu0 %v1081
      %1083 = vmatprep.subr.mxu0 0.0
      %v1084 = vand.u32 %v421, 4294901760
      %1085 = vmatpush1.msra.mxu0 %v1084
      %1086 = vmatprep.subr.mxu0 0.0
      %v1087 = vand.u32 %v422, 4294901760
      %1088 = vmatpush1.msra.mxu0 %v1087
      %1089 = vmatprep.subr.mxu0 0.0
      %v1090 = vand.u32 %v423, 4294901760
      %1091 = vmatpush1.msra.mxu0 %v1090
      %1092 = vmatprep.subr.mxu0 0.0
      %v1093 = vand.u32 %v424, 4294901760
      %1094 = vmatpush1.msra.mxu0 %v1093
      %1095 = vmatprep.subr.mxu0 0.0
      %v1096 = vand.u32 %v425, 4294901760
      %1097 = vmatpush1.msra.mxu0 %v1096
      %1098 = vmatprep.subr.mxu0 0.0
      %v1099 = vand.u32 %v426, 4294901760
      %1100 = vmatpush1.msra.mxu0 %v1099
      %1101 = vmatprep.subr.mxu0 0.0
      %v1102 = vand.u32 %v427, 4294901760
      %1103 = vmatpush1.msra.mxu0 %v1102
      %1104 = vmatprep.subr.mxu0 0.0
      %1105 = vmatpush1.msra.mxu0 0.0
      %1106 = vmatprep.subr.mxu0 0.0
      %1107 = vmatpush1.msra.mxu0 0.0
      %1108 = vmatprep.subr.mxu0 0.0
      %1109 = vmatpush1.msra.mxu0 0.0
      %1110 = vmatprep.subr.mxu0 0.0
      %1111 = vmatpush1.msra.mxu0 0.0
      %1112 = vmatprep.subr.mxu0 0.0
      %1113 = vmatpush1.msra.mxu0 0.0
      %1114 = vmatprep.subr.mxu0 0.0
      %1115 = vmatpush1.msra.mxu0 0.0
      %1116 = vmatprep.subr.mxu0 0.0
      %1117 = vmatpush1.msra.mxu0 0.0
      %1118 = vmatprep.subr.mxu0 0.0
      %1119 = vmatpush1.msra.mxu0 0.0
      %1120 = vmatprep.subr.mxu0 0.0
      %1121 = vmatpush1.msra.mxu0 0.0
      %1122 = vmatprep.subr.mxu0 0.0
      %1123 = vmatpush1.msra.mxu0 0.0
      %1124 = vmatprep.subr.mxu0 0.0
      %1125 = vmatpush1.msra.mxu0 0.0
      %1126 = vmatprep.subr.mxu0 0.0
      %1127 = vmatpush1.msra.mxu0 0.0
      %1128 = vmatprep.subr.mxu0 0.0
      %1129 = vmatpush1.msra.mxu0 0.0
      %1130 = vmatprep.subr.mxu0 0.0
      %1131 = vmatpush1.msra.mxu0 0.0
      %1132 = vmatprep.subr.mxu0 0.0
      %1133 = vmatpush1.msra.mxu0 0.0
      %1134 = vmatprep.subr.mxu0 0.0
      %1135 = vmatpush1.msra.mxu0 0.0
      %1136 = vmatprep.mubr.f32.mxu0 0.0
      %v1137 = vand.u32 %v409, 4294901760
      %1138 = vmatmul.mubr.f32.gmra.mrb[0].mxu0 %v1137
      %v1139 = vpop.f32.mrb[0].mxu0
      %v1140 = vadd.f32 %v1041, %v1139
      %v1141 = vpop.f32.mrb[0].mxu0
      %1142 = vmatprep.mubr.f32.mxu0 0.0
      %v1143 = vand.u32 %v410, 4294901760
      %1144 = vmatmul.mubr.f32.gmra.mrb[0].mxu0 %v1143
      %v1145 = vpop.f32.mrb[0].mxu0
      %v1146 = vadd.f32 %v1047, %v1145
      %v1147 = vpop.f32.mrb[0].mxu0
      %1148 = vmatprep.mubr.f32.mxu0 0.0
      %v1149 = vand.u32 %v411, 4294901760
      %1150 = vmatmul.mubr.f32.gmra.mrb[0].mxu0 %v1149
      %v1151 = vpop.f32.mrb[0].mxu0
      %v1152 = vadd.f32 %v1053, %v1151
      %v1153 = vpop.f32.mrb[0].mxu0
      %1154 = vdwg.mxu0
      %v1155 = vrsqrt.pop %v1140
      %v1156 = vrsqrt.pop %v1146
      %v1157 = vrsqrt.pop %v1152
      %v1158 = vmul.f32 %v1140, %v1155
      %v1159 = vmul.f32 %v1146, %v1156
      %v1160 = vmul.f32 %v1152, %v1157
      %v1161 = vadd.f32 %v1140, 1.0
      %v1162 = vadd.f32 %v1146, 1.0
      %v1163 = vadd.f32 %v1152, 1.0
      %v1164 = vrcp.pop %v1161
      %v1165 = vrcp.pop %v1162
      %v1166 = vrcp.pop %v1163
      %v1167 = vmul.f32 %v1158, %v1164
      %v1168 = vmul.f32 %v1159, %v1165
      %v1169 = vmul.f32 %v1160, %v1166
      %v1170 = vld [vmem:[%s4] sm:$0xff]
      %v1171 = vld [vmem:[%s4 + $0x8] sm:$0xff]
      %v1173 = vsel %vm284, %v1167, 0
      %v1176 = vsel %vm284, %v1168, 0
      %v1179 = vsel %vm284, %v1169, 0
      %1181 = vmatprep.subr.mxu0 0.0
      %v1182 = vand.u32 %v1170, 4294901760
      %1183 = vmatpush1.msra.mxu0 %v1182
      %1184 = vmatprep.subr.mxu0 0.0
      %v1185 = vand.u32 %v1171, 4294901760
      %1186 = vmatpush1.msra.mxu0 %v1185
      %1187 = vmatprep.subr.mxu0 0.0
      %1188 = vmatpush1.msra.mxu0 0.0
      %1189 = vmatprep.subr.mxu0 0.0
      %1190 = vmatpush1.msra.mxu0 0.0
      %1191 = vmatprep.subr.mxu0 0.0
      %1192 = vmatpush1.msra.mxu0 0.0
      %1193 = vmatprep.subr.mxu0 0.0
      %1194 = vmatpush1.msra.mxu0 0.0
      %1195 = vmatprep.subr.mxu0 0.0
      %1196 = vmatpush1.msra.mxu0 0.0
      %1197 = vmatprep.subr.mxu0 0.0
      %1198 = vmatpush1.msra.mxu0 0.0
      %1199 = vmatprep.subr.mxu0 0.0
      %1200 = vmatpush1.msra.mxu0 0.0
      %1201 = vmatprep.subr.mxu0 0.0
      %1202 = vmatpush1.msra.mxu0 0.0
      %1203 = vmatprep.subr.mxu0 0.0
      %1204 = vmatpush1.msra.mxu0 0.0
      %1205 = vmatprep.subr.mxu0 0.0
      %1206 = vmatpush1.msra.mxu0 0.0
      %1207 = vmatprep.subr.mxu0 0.0
      %1208 = vmatpush1.msra.mxu0 0.0
      %1209 = vmatprep.subr.mxu0 0.0
      %1210 = vmatpush1.msra.mxu0 0.0
      %1211 = vmatprep.subr.mxu0 0.0
      %1212 = vmatpush1.msra.mxu0 0.0
      %1213 = vmatprep.subr.mxu0 0.0
      %1214 = vmatpush1.msra.mxu0 0.0
      %1215 = vmatprep.subr.mxu0 0.0
      %1216 = vmatpush1.msra.mxu0 0.0
      %1217 = vmatprep.subr.mxu0 0.0
      %1218 = vmatpush1.msra.mxu0 0.0
      %1219 = vmatprep.subr.mxu0 0.0
      %1220 = vmatpush1.msra.mxu0 0.0
      %1221 = vmatprep.subr.mxu0 0.0
      %1222 = vmatpush1.msra.mxu0 0.0
      %1223 = vmatprep.subr.mxu0 0.0
      %1224 = vmatpush1.msra.mxu0 0.0
      %1225 = vmatprep.subr.mxu0 0.0
      %1226 = vmatpush1.msra.mxu0 0.0
      %1227 = vmatprep.subr.mxu0 0.0
      %1228 = vmatpush1.msra.mxu0 0.0
      %1229 = vmatprep.subr.mxu0 0.0
      %1230 = vmatpush1.msra.mxu0 0.0
      %1231 = vmatprep.subr.mxu0 0.0
      %1232 = vmatpush1.msra.mxu0 0.0
      %1233 = vmatprep.subr.mxu0 0.0
      %1234 = vmatpush1.msra.mxu0 0.0
      %1235 = vmatprep.subr.mxu0 0.0
      %1236 = vmatpush1.msra.mxu0 0.0
      %1237 = vmatprep.subr.mxu0 0.0
      %1238 = vmatpush1.msra.mxu0 0.0
      %1239 = vmatprep.subr.mxu0 0.0
      %1240 = vmatpush1.msra.mxu0 0.0
      %1241 = vmatprep.subr.mxu0 0.0
      %1242 = vmatpush1.msra.mxu0 0.0
      %1243 = vmatprep.subr.mxu0 0.0
      %1244 = vmatpush1.msra.mxu0 0.0
      %1245 = vmatprep.subr.mxu0 0.0
      %1246 = vmatpush1.msra.mxu0 0.0
      %1247 = vmatprep.mubr.f32.mxu0 0.0
      %v1248 = vand.u32 %v1173, 4294901760
      %v1249 = vsub.f32 %v1173, %v1248
      %v1250 = vand.u32 %v1249, 4294901760
      %v1251 = vsub.f32 %v1249, %v1250
      %v1252 = vand.u32 %v1251, 4294901760
      %1253 = vmatmul.mubr.f32.gmra.mrb[0].mxu0 %v1252
      %v1254 = vpop.f32.mrb[0].mxu0
      %v1255 = vadd.f32 0.0, %v1254
      %v1256 = vpop.f32.mrb[0].mxu0
      %1257 = vmatprep.mubr.f32.mxu0 0.0
      %v1258 = vand.u32 %v1176, 4294901760
      %v1259 = vsub.f32 %v1176, %v1258
      %v1260 = vand.u32 %v1259, 4294901760
      %v1261 = vsub.f32 %v1259, %v1260
      %v1262 = vand.u32 %v1261, 4294901760
      %1263 = vmatmul.mubr.f32.gmra.mrb[0].mxu0 %v1262
      %v1264 = vpop.f32.mrb[0].mxu0
      %v1265 = vadd.f32 0.0, %v1264
      %v1266 = vpop.f32.mrb[0].mxu0
      %1267 = vmatprep.mubr.f32.mxu0 0.0
      %v1268 = vand.u32 %v1179, 4294901760
      %v1269 = vsub.f32 %v1179, %v1268
      %v1270 = vand.u32 %v1269, 4294901760
      %v1271 = vsub.f32 %v1269, %v1270
      %v1272 = vand.u32 %v1271, 4294901760
      %1273 = vmatmul.mubr.f32.gmra.mrb[0].mxu0 %v1272
      %v1274 = vpop.f32.mrb[0].mxu0
      %v1275 = vadd.f32 0.0, %v1274
      %v1276 = vpop.f32.mrb[0].mxu0
      %1277 = vdwg.mxu0
      %1278 = vmatprep.subr.mxu0 0.0
      %v1279 = vand.u32 %v1170, 4294901760
      %v1280 = vsub.f32 %v1170, %v1279
      %v1281 = vand.u32 %v1280, 4294901760
      %v1282 = vsub.f32 %v1280, %v1281
      %v1283 = vand.u32 %v1282, 4294901760
      %1284 = vmatpush1.msra.mxu0 %v1283
      %1285 = vmatprep.subr.mxu0 0.0
      %v1286 = vand.u32 %v1171, 4294901760
      %v1287 = vsub.f32 %v1171, %v1286
      %v1288 = vand.u32 %v1287, 4294901760
      %v1289 = vsub.f32 %v1287, %v1288
      %v1290 = vand.u32 %v1289, 4294901760
      %1291 = vmatpush1.msra.mxu0 %v1290
      %1292 = vmatprep.subr.mxu0 0.0
      %1293 = vmatpush1.msra.mxu0 0.0
      %1294 = vmatprep.subr.mxu0 0.0
      %1295 = vmatpush1.msra.mxu0 0.0
      %1296 = vmatprep.subr.mxu0 0.0
      %1297 = vmatpush1.msra.mxu0 0.0
      %1298 = vmatprep.subr.mxu0 0.0
      %1299 = vmatpush1.msra.mxu0 0.0
      %1300 = vmatprep.subr.mxu0 0.0
      %1301 = vmatpush1.msra.mxu0 0.0
      %1302 = vmatprep.subr.mxu0 0.0
      %1303 = vmatpush1.msra.mxu0 0.0
      %1304 = vmatprep.subr.mxu0 0.0
      %1305 = vmatpush1.msra.mxu0 0.0
      %1306 = vmatprep.subr.mxu0 0.0
      %1307 = vmatpush1.msra.mxu0 0.0
      %1308 = vmatprep.subr.mxu0 0.0
      %1309 = vmatpush1.msra.mxu0 0.0
      %1310 = vmatprep.subr.mxu0 0.0
      %1311 = vmatpush1.msra.mxu0 0.0
      %1312 = vmatprep.subr.mxu0 0.0
      %1313 = vmatpush1.msra.mxu0 0.0
      %1314 = vmatprep.subr.mxu0 0.0
      %1315 = vmatpush1.msra.mxu0 0.0
      %1316 = vmatprep.subr.mxu0 0.0
      %1317 = vmatpush1.msra.mxu0 0.0
      %1318 = vmatprep.subr.mxu0 0.0
      %1319 = vmatpush1.msra.mxu0 0.0
      %1320 = vmatprep.subr.mxu0 0.0
      %1321 = vmatpush1.msra.mxu0 0.0
      %1322 = vmatprep.subr.mxu0 0.0
      %1323 = vmatpush1.msra.mxu0 0.0
      %1324 = vmatprep.subr.mxu0 0.0
      %1325 = vmatpush1.msra.mxu0 0.0
      %1326 = vmatprep.subr.mxu0 0.0
      %1327 = vmatpush1.msra.mxu0 0.0
      %1328 = vmatprep.subr.mxu0 0.0
      %1329 = vmatpush1.msra.mxu0 0.0
      %1330 = vmatprep.subr.mxu0 0.0
      %1331 = vmatpush1.msra.mxu0 0.0
      %1332 = vmatprep.subr.mxu0 0.0
      %1333 = vmatpush1.msra.mxu0 0.0
      %1334 = vmatprep.subr.mxu0 0.0
      %1335 = vmatpush1.msra.mxu0 0.0
      %1336 = vmatprep.subr.mxu0 0.0
      %1337 = vmatpush1.msra.mxu0 0.0
      %1338 = vmatprep.subr.mxu0 0.0
      %1339 = vmatpush1.msra.mxu0 0.0
      %1340 = vmatprep.subr.mxu0 0.0
      %1341 = vmatpush1.msra.mxu0 0.0
      %1342 = vmatprep.subr.mxu0 0.0
      %1343 = vmatpush1.msra.mxu0 0.0
      %1344 = vmatprep.subr.mxu0 0.0
      %1345 = vmatpush1.msra.mxu0 0.0
      %1346 = vmatprep.subr.mxu0 0.0
      %1347 = vmatpush1.msra.mxu0 0.0
      %1348 = vmatprep.subr.mxu0 0.0
      %1349 = vmatpush1.msra.mxu0 0.0
      %1350 = vmatprep.subr.mxu0 0.0
      %1351 = vmatpush1.msra.mxu0 0.0
      %1352 = vmatprep.mubr.f32.mxu0 0.0
      %v1353 = vand.u32 %v1173, 4294901760
      %1354 = vmatmul.mubr.f32.gmra.mrb[0].mxu0 %v1353
      %v1355 = vpop.f32.mrb[0].mxu0
      %v1356 = vadd.f32 %v1255, %v1355
      %v1357 = vpop.f32.mrb[0].mxu0
      %1358 = vmatprep.mubr.f32.mxu0 0.0
      %v1359 = vand.u32 %v1176, 4294901760
      %1360 = vmatmul.mubr.f32.gmra.mrb[0].mxu0 %v1359
      %v1361 = vpop.f32.mrb[0].mxu0
      %v1362 = vadd.f32 %v1265, %v1361
      %v1363 = vpop.f32.mrb[0].mxu0
      %1364 = vmatprep.mubr.f32.mxu0 0.0
      %v1365 = vand.u32 %v1179, 4294901760
      %1366 = vmatmul.mubr.f32.gmra.mrb[0].mxu0 %v1365
      %v1367 = vpop.f32.mrb[0].mxu0
      %v1368 = vadd.f32 %v1275, %v1367
      %v1369 = vpop.f32.mrb[0].mxu0
      %1370 = vdwg.mxu0
      %1371 = vmatprep.subr.mxu0 0.0
      %v1372 = vand.u32 %v1170, 4294901760
      %v1373 = vsub.f32 %v1170, %v1372
      %1374 = vmatpush1.msra.mxu0 %v1373
      %1375 = vmatprep.subr.mxu0 0.0
      %v1376 = vand.u32 %v1171, 4294901760
      %v1377 = vsub.f32 %v1171, %v1376
      %1378 = vmatpush1.msra.mxu0 %v1377
      %1379 = vmatprep.subr.mxu0 0.0
      %1380 = vmatpush1.msra.mxu0 0.0
      %1381 = vmatprep.subr.mxu0 0.0
      %1382 = vmatpush1.msra.mxu0 0.0
      %1383 = vmatprep.subr.mxu0 0.0
      %1384 = vmatpush1.msra.mxu0 0.0
      %1385 = vmatprep.subr.mxu0 0.0
      %1386 = vmatpush1.msra.mxu0 0.0
      %1387 = vmatprep.subr.mxu0 0.0
      %1388 = vmatpush1.msra.mxu0 0.0
      %1389 = vmatprep.subr.mxu0 0.0
      %1390 = vmatpush1.msra.mxu0 0.0
      %1391 = vmatprep.subr.mxu0 0.0
      %1392 = vmatpush1.msra.mxu0 0.0
      %1393 = vmatprep.subr.mxu0 0.0
      %1394 = vmatpush1.msra.mxu0 0.0
      %1395 = vmatprep.subr.mxu0 0.0
      %1396 = vmatpush1.msra.mxu0 0.0
      %1397 = vmatprep.subr.mxu0 0.0
      %1398 = vmatpush1.msra.mxu0 0.0
      %1399 = vmatprep.subr.mxu0 0.0
      %1400 = vmatpush1.msra.mxu0 0.0
      %1401 = vmatprep.subr.mxu0 0.0
      %1402 = vmatpush1.msra.mxu0 0.0
      %1403 = vmatprep.subr.mxu0 0.0
      %1404 = vmatpush1.msra.mxu0 0.0
      %1405 = vmatprep.subr.mxu0 0.0
      %1406 = vmatpush1.msra.mxu0 0.0
      %1407 = vmatprep.subr.mxu0 0.0
      %1408 = vmatpush1.msra.mxu0 0.0
      %1409 = vmatprep.subr.mxu0 0.0
      %1410 = vmatpush1.msra.mxu0 0.0
      %1411 = vmatprep.subr.mxu0 0.0
      %1412 = vmatpush1.msra.mxu0 0.0
      %1413 = vmatprep.subr.mxu0 0.0
      %1414 = vmatpush1.msra.mxu0 0.0
      %1415 = vmatprep.subr.mxu0 0.0
      %1416 = vmatpush1.msra.mxu0 0.0
      %1417 = vmatprep.subr.mxu0 0.0
      %1418 = vmatpush1.msra.mxu0 0.0
      %1419 = vmatprep.subr.mxu0 0.0
      %1420 = vmatpush1.msra.mxu0 0.0
      %1421 = vmatprep.subr.mxu0 0.0
      %1422 = vmatpush1.msra.mxu0 0.0
      %1423 = vmatprep.subr.mxu0 0.0
      %1424 = vmatpush1.msra.mxu0 0.0
      %1425 = vmatprep.subr.mxu0 0.0
      %1426 = vmatpush1.msra.mxu0 0.0
      %1427 = vmatprep.subr.mxu0 0.0
      %1428 = vmatpush1.msra.mxu0 0.0
      %1429 = vmatprep.subr.mxu0 0.0
      %1430 = vmatpush1.msra.mxu0 0.0
      %1431 = vmatprep.subr.mxu0 0.0
      %1432 = vmatpush1.msra.mxu0 0.0
      %1433 = vmatprep.subr.mxu0 0.0
      %1434 = vmatpush1.msra.mxu0 0.0
      %1435 = vmatprep.subr.mxu0 0.0
      %1436 = vmatpush1.msra.mxu0 0.0
      %1437 = vmatprep.subr.mxu0 0.0
      %1438 = vmatpush1.msra.mxu0 0.0
      %1439 = vmatprep.mubr.f32.mxu0 0.0
      %v1440 = vand.u32 %v1173, 4294901760
      %v1441 = vsub.f32 %v1173, %v1440
      %1442 = vmatmul.mubr.f32.gmra.mrb[0].mxu0 %v1441
      %v1443 = vpop.f32.mrb[0].mxu0
      %v1444 = vadd.f32 %v1356, %v1443
      %v1445 = vpop.f32.mrb[0].mxu0
      %1446 = vmatprep.mubr.f32.mxu0 0.0
      %v1447 = vand.u32 %v1176, 4294901760
      %v1448 = vsub.f32 %v1176, %v1447
      %1449 = vmatmul.mubr.f32.gmra.mrb[0].mxu0 %v1448
      %v1450 = vpop.f32.mrb[0].mxu0
      %v1451 = vadd.f32 %v1362, %v1450
      %v1452 = vpop.f32.mrb[0].mxu0
      %1453 = vmatprep.mubr.f32.mxu0 0.0
      %v1454 = vand.u32 %v1179, 4294901760
      %v1455 = vsub.f32 %v1179, %v1454
      %1456 = vmatmul.mubr.f32.gmra.mrb[0].mxu0 %v1455
      %v1457 = vpop.f32.mrb[0].mxu0
      %v1458 = vadd.f32 %v1368, %v1457
      %v1459 = vpop.f32.mrb[0].mxu0
      %1460 = vdwg.mxu0
      %1461 = vmatprep.subr.mxu0 0.0
      %v1462 = vand.u32 %v1170, 4294901760
      %1463 = vmatpush1.msra.mxu0 %v1462
      %1464 = vmatprep.subr.mxu0 0.0
      %v1465 = vand.u32 %v1171, 4294901760
      %1466 = vmatpush1.msra.mxu0 %v1465
      %1467 = vmatprep.subr.mxu0 0.0
      %1468 = vmatpush1.msra.mxu0 0.0
      %1469 = vmatprep.subr.mxu0 0.0
      %1470 = vmatpush1.msra.mxu0 0.0
      %1471 = vmatprep.subr.mxu0 0.0
      %1472 = vmatpush1.msra.mxu0 0.0
      %1473 = vmatprep.subr.mxu0 0.0
      %1474 = vmatpush1.msra.mxu0 0.0
      %1475 = vmatprep.subr.mxu0 0.0
      %1476 = vmatpush1.msra.mxu0 0.0
      %1477 = vmatprep.subr.mxu0 0.0
      %1478 = vmatpush1.msra.mxu0 0.0
      %1479 = vmatprep.subr.mxu0 0.0
      %1480 = vmatpush1.msra.mxu0 0.0
      %1481 = vmatprep.subr.mxu0 0.0
      %1482 = vmatpush1.msra.mxu0 0.0
      %1483 = vmatprep.subr.mxu0 0.0
      %1484 = vmatpush1.msra.mxu0 0.0
      %1485 = vmatprep.subr.mxu0 0.0
      %1486 = vmatpush1.msra.mxu0 0.0
      %1487 = vmatprep.subr.mxu0 0.0
      %1488 = vmatpush1.msra.mxu0 0.0
      %1489 = vmatprep.subr.mxu0 0.0
      %1490 = vmatpush1.msra.mxu0 0.0
      %1491 = vmatprep.subr.mxu0 0.0
      %1492 = vmatpush1.msra.mxu0 0.0
      %1493 = vmatprep.subr.mxu0 0.0
      %1494 = vmatpush1.msra.mxu0 0.0
      %1495 = vmatprep.subr.mxu0 0.0
      %1496 = vmatpush1.msra.mxu0 0.0
      %1497 = vmatprep.subr.mxu0 0.0
      %1498 = vmatpush1.msra.mxu0 0.0
      %1499 = vmatprep.subr.mxu0 0.0
      %1500 = vmatpush1.msra.mxu0 0.0
      %1501 = vmatprep.subr.mxu0 0.0
      %1502 = vmatpush1.msra.mxu0 0.0
      %1503 = vmatprep.subr.mxu0 0.0
      %1504 = vmatpush1.msra.mxu0 0.0
      %1505 = vmatprep.subr.mxu0 0.0
      %1506 = vmatpush1.msra.mxu0 0.0
      %1507 = vmatprep.subr.mxu0 0.0
      %1508 = vmatpush1.msra.mxu0 0.0
      %1509 = vmatprep.subr.mxu0 0.0
      %1510 = vmatpush1.msra.mxu0 0.0
      %1511 = vmatprep.subr.mxu0 0.0
      %1512 = vmatpush1.msra.mxu0 0.0
      %1513 = vmatprep.subr.mxu0 0.0
      %1514 = vmatpush1.msra.mxu0 0.0
      %1515 = vmatprep.subr.mxu0 0.0
      %1516 = vmatpush1.msra.mxu0 0.0
      %1517 = vmatprep.subr.mxu0 0.0
      %1518 = vmatpush1.msra.mxu0 0.0
      %1519 = vmatprep.subr.mxu0 0.0
      %1520 = vmatpush1.msra.mxu0 0.0
      %1521 = vmatprep.subr.mxu0 0.0
      %1522 = vmatpush1.msra.mxu0 0.0
      %1523 = vmatprep.subr.mxu0 0.0
      %1524 = vmatpush1.msra.mxu0 0.0
      %1525 = vmatprep.subr.mxu0 0.0
      %1526 = vmatpush1.msra.mxu0 0.0
      %1527 = vmatprep.mubr.f32.mxu0 0.0
      %v1528 = vand.u32 %v1173, 4294901760
      %v1529 = vsub.f32 %v1173, %v1528
      %v1530 = vand.u32 %v1529, 4294901760
      %1531 = vmatmul.mubr.f32.gmra.mrb[0].mxu0 %v1530
      %v1532 = vpop.f32.mrb[0].mxu0
      %v1533 = vadd.f32 %v1444, %v1532
      %v1534 = vpop.f32.mrb[0].mxu0
      %1535 = vmatprep.mubr.f32.mxu0 0.0
      %v1536 = vand.u32 %v1176, 4294901760
      %v1537 = vsub.f32 %v1176, %v1536
      %v1538 = vand.u32 %v1537, 4294901760
      %1539 = vmatmul.mubr.f32.gmra.mrb[0].mxu0 %v1538
      %v1540 = vpop.f32.mrb[0].mxu0
      %v1541 = vadd.f32 %v1451, %v1540
      %v1542 = vpop.f32.mrb[0].mxu0
      %1543 = vmatprep.mubr.f32.mxu0 0.0
      %v1544 = vand.u32 %v1179, 4294901760
      %v1545 = vsub.f32 %v1179, %v1544
      %v1546 = vand.u32 %v1545, 4294901760
      %1547 = vmatmul.mubr.f32.gmra.mrb[0].mxu0 %v1546
      %v1548 = vpop.f32.mrb[0].mxu0
      %v1549 = vadd.f32 %v1458, %v1548
      %v1550 = vpop.f32.mrb[0].mxu0
      %1551 = vdwg.mxu0
      %1552 = vmatprep.subr.mxu0 0.0
      %v1553 = vand.u32 %v1170, 4294901760
      %v1554 = vsub.f32 %v1170, %v1553
      %v1555 = vand.u32 %v1554, 4294901760
      %1556 = vmatpush1.msra.mxu0 %v1555
      %1557 = vmatprep.subr.mxu0 0.0
      %v1558 = vand.u32 %v1171, 4294901760
      %v1559 = vsub.f32 %v1171, %v1558
      %v1560 = vand.u32 %v1559, 4294901760
      %1561 = vmatpush1.msra.mxu0 %v1560
      %1562 = vmatprep.subr.mxu0 0.0
      %1563 = vmatpush1.msra.mxu0 0.0
      %1564 = vmatprep.subr.mxu0 0.0
      %1565 = vmatpush1.msra.mxu0 0.0
      %1566 = vmatprep.subr.mxu0 0.0
      %1567 = vmatpush1.msra.mxu0 0.0
      %1568 = vmatprep.subr.mxu0 0.0
      %1569 = vmatpush1.msra.mxu0 0.0
      %1570 = vmatprep.subr.mxu0 0.0
      %1571 = vmatpush1.msra.mxu0 0.0
      %1572 = vmatprep.subr.mxu0 0.0
      %1573 = vmatpush1.msra.mxu0 0.0
      %1574 = vmatprep.subr.mxu0 0.0
      %1575 = vmatpush1.msra.mxu0 0.0
      %1576 = vmatprep.subr.mxu0 0.0
      %1577 = vmatpush1.msra.mxu0 0.0
      %1578 = vmatprep.subr.mxu0 0.0
      %1579 = vmatpush1.msra.mxu0 0.0
      %1580 = vmatprep.subr.mxu0 0.0
      %1581 = vmatpush1.msra.mxu0 0.0
      %1582 = vmatprep.subr.mxu0 0.0
      %1583 = vmatpush1.msra.mxu0 0.0
      %1584 = vmatprep.subr.mxu0 0.0
      %1585 = vmatpush1.msra.mxu0 0.0
      %1586 = vmatprep.subr.mxu0 0.0
      %1587 = vmatpush1.msra.mxu0 0.0
      %1588 = vmatprep.subr.mxu0 0.0
      %1589 = vmatpush1.msra.mxu0 0.0
      %1590 = vmatprep.subr.mxu0 0.0
      %1591 = vmatpush1.msra.mxu0 0.0
      %1592 = vmatprep.subr.mxu0 0.0
      %1593 = vmatpush1.msra.mxu0 0.0
      %1594 = vmatprep.subr.mxu0 0.0
      %1595 = vmatpush1.msra.mxu0 0.0
      %1596 = vmatprep.subr.mxu0 0.0
      %1597 = vmatpush1.msra.mxu0 0.0
      %1598 = vmatprep.subr.mxu0 0.0
      %1599 = vmatpush1.msra.mxu0 0.0
      %1600 = vmatprep.subr.mxu0 0.0
      %1601 = vmatpush1.msra.mxu0 0.0
      %1602 = vmatprep.subr.mxu0 0.0
      %1603 = vmatpush1.msra.mxu0 0.0
      %1604 = vmatprep.subr.mxu0 0.0
      %1605 = vmatpush1.msra.mxu0 0.0
      %1606 = vmatprep.subr.mxu0 0.0
      %1607 = vmatpush1.msra.mxu0 0.0
      %1608 = vmatprep.subr.mxu0 0.0
      %1609 = vmatpush1.msra.mxu0 0.0
      %1610 = vmatprep.subr.mxu0 0.0
      %1611 = vmatpush1.msra.mxu0 0.0
      %1612 = vmatprep.subr.mxu0 0.0
      %1613 = vmatpush1.msra.mxu0 0.0
      %1614 = vmatprep.subr.mxu0 0.0
      %1615 = vmatpush1.msra.mxu0 0.0
      %1616 = vmatprep.subr.mxu0 0.0
      %1617 = vmatpush1.msra.mxu0 0.0
      %1618 = vmatprep.subr.mxu0 0.0
      %1619 = vmatpush1.msra.mxu0 0.0
      %1620 = vmatprep.subr.mxu0 0.0
      %1621 = vmatpush1.msra.mxu0 0.0
      %1622 = vmatprep.mubr.f32.mxu0 0.0
      %v1623 = vand.u32 %v1173, 4294901760
      %1624 = vmatmul.mubr.f32.gmra.mrb[0].mxu0 %v1623
      %v1625 = vpop.f32.mrb[0].mxu0
      %v1626 = vadd.f32 %v1533, %v1625
      %v1627 = vpop.f32.mrb[0].mxu0
      %1628 = vmatprep.mubr.f32.mxu0 0.0
      %v1629 = vand.u32 %v1176, 4294901760
      %1630 = vmatmul.mubr.f32.gmra.mrb[0].mxu0 %v1629
      %v1631 = vpop.f32.mrb[0].mxu0
      %v1632 = vadd.f32 %v1541, %v1631
      %v1633 = vpop.f32.mrb[0].mxu0
      %1634 = vmatprep.mubr.f32.mxu0 0.0
      %v1635 = vand.u32 %v1179, 4294901760
      %1636 = vmatmul.mubr.f32.gmra.mrb[0].mxu0 %v1635
      %v1637 = vpop.f32.mrb[0].mxu0
      %v1638 = vadd.f32 %v1549, %v1637
      %v1639 = vpop.f32.mrb[0].mxu0
      %1640 = vdwg.mxu0
      %1641 = vmatprep.subr.mxu0 0.0
      %v1642 = vand.u32 %v1170, 4294901760
      %1643 = vmatpush1.msra.mxu0 %v1642
      %1644 = vmatprep.subr.mxu0 0.0
      %v1645 = vand.u32 %v1171, 4294901760
      %1646 = vmatpush1.msra.mxu0 %v1645
      %1647 = vmatprep.subr.mxu0 0.0
      %1648 = vmatpush1.msra.mxu0 0.0
      %1649 = vmatprep.subr.mxu0 0.0
      %1650 = vmatpush1.msra.mxu0 0.0
      %1651 = vmatprep.subr.mxu0 0.0
      %1652 = vmatpush1.msra.mxu0 0.0
      %1653 = vmatprep.subr.mxu0 0.0
      %1654 = vmatpush1.msra.mxu0 0.0
      %1655 = vmatprep.subr.mxu0 0.0
      %1656 = vmatpush1.msra.mxu0 0.0
      %1657 = vmatprep.subr.mxu0 0.0
      %1658 = vmatpush1.msra.mxu0 0.0
      %1659 = vmatprep.subr.mxu0 0.0
      %1660 = vmatpush1.msra.mxu0 0.0
      %1661 = vmatprep.subr.mxu0 0.0
      %1662 = vmatpush1.msra.mxu0 0.0
      %1663 = vmatprep.subr.mxu0 0.0
      %1664 = vmatpush1.msra.mxu0 0.0
      %1665 = vmatprep.subr.mxu0 0.0
      %1666 = vmatpush1.msra.mxu0 0.0
      %1667 = vmatprep.subr.mxu0 0.0
      %1668 = vmatpush1.msra.mxu0 0.0
      %1669 = vmatprep.subr.mxu0 0.0
      %1670 = vmatpush1.msra.mxu0 0.0
      %1671 = vmatprep.subr.mxu0 0.0
      %1672 = vmatpush1.msra.mxu0 0.0
      %1673 = vmatprep.subr.mxu0 0.0
      %1674 = vmatpush1.msra.mxu0 0.0
      %1675 = vmatprep.subr.mxu0 0.0
      %1676 = vmatpush1.msra.mxu0 0.0
      %1677 = vmatprep.subr.mxu0 0.0
      %1678 = vmatpush1.msra.mxu0 0.0
      %1679 = vmatprep.subr.mxu0 0.0
      %1680 = vmatpush1.msra.mxu0 0.0
      %1681 = vmatprep.subr.mxu0 0.0
      %1682 = vmatpush1.msra.mxu0 0.0
      %1683 = vmatprep.subr.mxu0 0.0
      %1684 = vmatpush1.msra.mxu0 0.0
      %1685 = vmatprep.subr.mxu0 0.0
      %1686 = vmatpush1.msra.mxu0 0.0
      %1687 = vmatprep.subr.mxu0 0.0
      %1688 = vmatpush1.msra.mxu0 0.0
      %1689 = vmatprep.subr.mxu0 0.0
      %1690 = vmatpush1.msra.mxu0 0.0
      %1691 = vmatprep.subr.mxu0 0.0
      %1692 = vmatpush1.msra.mxu0 0.0
      %1693 = vmatprep.subr.mxu0 0.0
      %1694 = vmatpush1.msra.mxu0 0.0
      %1695 = vmatprep.subr.mxu0 0.0
      %1696 = vmatpush1.msra.mxu0 0.0
      %1697 = vmatprep.subr.mxu0 0.0
      %1698 = vmatpush1.msra.mxu0 0.0
      %1699 = vmatprep.subr.mxu0 0.0
      %1700 = vmatpush1.msra.mxu0 0.0
      %1701 = vmatprep.subr.mxu0 0.0
      %1702 = vmatpush1.msra.mxu0 0.0
      %1703 = vmatprep.subr.mxu0 0.0
      %1704 = vmatpush1.msra.mxu0 0.0
      %1705 = vmatprep.subr.mxu0 0.0
      %1706 = vmatpush1.msra.mxu0 0.0
      %1707 = vmatprep.mubr.f32.mxu0 0.0
      %v1708 = vand.u32 %v1173, 4294901760
      %1709 = vmatmul.mubr.f32.gmra.mrb[0].mxu0 %v1708
      %v1710 = vpop.f32.mrb[0].mxu0
      %v1711 = vadd.f32 %v1626, %v1710
      %v1712 = vpop.f32.mrb[0].mxu0
      %1713 = vmatprep.mubr.f32.mxu0 0.0
      %v1714 = vand.u32 %v1176, 4294901760
      %1715 = vmatmul.mubr.f32.gmra.mrb[0].mxu0 %v1714
      %v1716 = vpop.f32.mrb[0].mxu0
      %v1717 = vadd.f32 %v1632, %v1716
      %v1718 = vpop.f32.mrb[0].mxu0
      %1719 = vmatprep.mubr.f32.mxu0 0.0
      %v1720 = vand.u32 %v1179, 4294901760
      %1721 = vmatmul.mubr.f32.gmra.mrb[0].mxu0 %v1720
      %v1722 = vpop.f32.mrb[0].mxu0
      %v1723 = vadd.f32 %v1638, %v1722
      %v1724 = vpop.f32.mrb[0].mxu0
      %1725 = vdwg.mxu0
      %v1726 = vmul.f32 %v406, %v1711
      %v1727 = vmul.f32 %v407, %v1717
      %v1728 = vmul.f32 %v408, %v1723
      %1729 = vst [vmem:[#allocation5] sm:$0xff] %v1726
      %1730 = vst [vmem:[#allocation5 + $0x8] sm:$0xff] %v1727
      %1731 = vst [vmem:[#allocation5 + $0x10] sm:$0x3] %v1728
    $region33: #{tpu_custom_call.1} parent=1 // pred_fallthru
      _
    // Predicated region
    $region34: #{tpu_custom_call.1} parent=1 // pred_check
      _
    $region35: #{tpu_custom_call.1} parent=1 // pred_check_branch
      %1733 = sbr.rel (0) target = $region37
    $region36: #{tpu_custom_call.1} parent=1 // pred_region
      %s1735 = ssub.s32 384, 384
      %1736 = vsyncadd [#allocation4], %s1735
      %s1737 = sshll.u32 [#allocation5], 4
      %s1738 = int_to_ptr.vmem [resolvable:$true] %s1737
      %1743 = dma.vmem_to_hbm [thread:$0]  %s1738, 384, %s5, [#allocation4], 128, 128, 8
    $region37: #{tpu_custom_call.1} parent=1 // pred_fallthru
      _
    // Predicated region
    $region38: #{tpu_custom_call.1} parent=1 // pred_check
      _
    $region39: #{tpu_custom_call.1} parent=1 // pred_check_branch
      %1745 = sbr.rel (0) target = $region41
    $region40: #{tpu_custom_call.1} parent=1 // pred_region
      %1746 = dma.done [#allocation4], 384
    $region41: #{tpu_custom_call.1} parent=1 // pred_fallthru
      _
    %1747 = vsyncpa [#allocation3], 1
    %1748 = vsyncpa [#allocation4], 1

</llo_original>
